<compile_context>
chip_gen: v5e
topology: v5e:2x2
jax: 0.10.0
libtpu: 0.0.40
codegen_flags: <defaults>
</compile_context>

<pallas_src>
import functools

import jax
import jax.numpy as jnp
import numpy as np
from jax.experimental import pallas as pl
from jax.experimental.pallas import tpu as pltpu


# ----------------------------------------------------------------------------
# Fused Pallas kernel:
#   1) 1x1-conv stand-in:  x:(H*W, Kpad) @ w:(Kpad, C) + b:(1, C) -> feat (H*W, C)
#   2) torchvision.ops.roi_pool on that feature map for one ROI, done separably:
#        stage 1: per pooled-column window, max over W   -> (H, C) x PW
#        stage 2: per pooled-row    window, max over H   -> (1, PW*C) x PH
#      Output is one lane-dense slab (PH, PW*C), stored once.
#
#   roi_ref (SMEM, f32[8]) = [batch_idx, x1, y1, x2, y2, spatial_scale, 0, 0]
# ----------------------------------------------------------------------------
def _fused_feature_roipool_kernel(
    roi_ref, x_ref, w_ref, b_ref, pooled_ref, feat_ref, *, H, W, C, PH, PW
):
    # ---- 1x1 conv (matmul) ----
    feat2d = (
        jnp.dot(x_ref[...], w_ref[...], preferred_element_type=jnp.float32)
        + b_ref[...]
    )  # (H*W, C)
    feat_ref[...] = feat2d  # exported for the host-side correctness check
    feat = feat2d.reshape(H, W, C)  # W is a multiple of 8 -> no-op retiling

    # ---- ROI box math (identical to torchvision.ops.roi_pool) ----
    scale = roi_ref[5]
    # torchvision uses C round() (half away from zero); coords are >= 0 here.
    roi_start_w = jnp.floor(roi_ref[1] * scale + 0.5).astype(jnp.int32)
    roi_start_h = jnp.floor(roi_ref[2] * scale + 0.5).astype(jnp.int32)
    roi_end_w = jnp.floor(roi_ref[3] * scale + 0.5).astype(jnp.int32)
    roi_end_h = jnp.floor(roi_ref[4] * scale + 0.5).astype(jnp.int32)

    roi_w = jnp.maximum(roi_end_w - roi_start_w + 1, 1)
    roi_h = jnp.maximum(roi_end_h - roi_start_h + 1, 1)
    bin_h = roi_h.astype(jnp.float32) / jnp.float32(PH)
    bin_w = roi_w.astype(jnp.float32) / jnp.float32(PW)

    neg_inf = jnp.float32(-jnp.inf)
    col = jax.lax.broadcasted_iota(jnp.int32, (1, W, C), 1)  # column index
    row = jax.lax.broadcasted_iota(jnp.int32, (H, 1), 0)     # row index

    # ---- Stage 1: pooled-column windows, max over W -> (H, C) per window ----
    col_slabs = []
    for pw in range(PW):
        wstart = jnp.clip(
            jnp.floor(jnp.float32(pw) * bin_w).astype(jnp.int32) + roi_start_w, 0, W
        )
        wend = jnp.clip(
            jnp.ceil(jnp.float32(pw + 1) * bin_w).astype(jnp.int32) + roi_start_w, 0, W
        )
        cmask = (col >= wstart) & (col < wend)               # (1, W, C)
        cmax = jnp.max(jnp.where(cmask, feat, neg_inf), axis=1)   # (H, C)
        # Empty column window => every bin in this pooled column is empty => 0.
        cmax = jnp.where(wend <= wstart, jnp.float32(0.0), cmax)
        col_slabs.append(cmax)
    inter = jnp.concatenate(col_slabs, axis=1)               # (H, PW*C) lane-dense

    # ---- Stage 2: pooled-row windows, max over H -> (1, PW*C) per window ----
    out_rows = []
    for ph in range(PH):
        hstart = jnp.clip(
            jnp.floor(jnp.float32(ph) * bin_h).astype(jnp.int32) + roi_start_h, 0, H
        )
        hend = jnp.clip(
            jnp.ceil(jnp.float32(ph + 1) * bin_h).astype(jnp.int32) + roi_start_h, 0, H
        )
        rmask = (row >= hstart) & (row < hend)               # (H, 1)
        rmax = jnp.max(jnp.where(rmask, inter, neg_inf), axis=0, keepdims=True)
        # Empty row window => every bin in this pooled row is empty => 0.
        rmax = jnp.where(hend <= hstart, jnp.float32(0.0), rmax)
        out_rows.append(rmax)

    # Single lane-dense slab store: (PH, PW*C) with PW*C a multiple of 128.
    pooled_ref[...] = jnp.concatenate(out_rows, axis=0)


def fused_feature_roipool(x_pad, w_pad, b, roi_smem, *, FH, FW, C, PH=7, PW=7):
    hw = FH * FW
    kernel = functools.partial(
        _fused_feature_roipool_kernel, H=FH, W=FW, C=C, PH=PH, PW=PW
    )
    pooled, feat = pl.pallas_call(
        kernel,
        out_shape=(
            jax.ShapeDtypeStruct((PH, PW * C), jnp.float32),
            jax.ShapeDtypeStruct((hw, C), jnp.float32),
        ),
        in_specs=[
            pl.BlockSpec(memory_space=pltpu.MemorySpace.SMEM),   # roi scalars
            pl.BlockSpec(memory_space=pltpu.MemorySpace.VMEM),   # x (space-to-depth)
            pl.BlockSpec(memory_space=pltpu.MemorySpace.VMEM),   # w
            pl.BlockSpec(memory_space=pltpu.MemorySpace.VMEM),   # b
        ],
        out_specs=(
            pl.BlockSpec(memory_space=pltpu.MemorySpace.VMEM),
            pl.BlockSpec(memory_space=pltpu.MemorySpace.VMEM),
        ),
    )(roi_smem, x_pad, w_pad, b)
    return pooled, feat


# ----------------------------------------------------------------------------
# Pure-numpy reference for roi_pool (bin math in float32, mirroring torchvision's
# float path and the kernel exactly).
# ----------------------------------------------------------------------------
def roi_pool_ref(feat_hwc, roi, spatial_scale, pooled_h=7, pooled_w=7):
    H, W, C = feat_hwc.shape
    feat = np.asarray(feat_hwc, np.float32)
    r = np.asarray(roi, np.float32)
    s = np.float32(spatial_scale)
    rsw = int(np.floor(r[1] * s + np.float32(0.5)))
    rsh = int(np.floor(r[2] * s + np.float32(0.5)))
    rew = int(np.floor(r[3] * s + np.float32(0.5)))
    reh = int(np.floor(r[4] * s + np.float32(0.5)))
    rw = max(rew - rsw + 1, 1)
    rh = max(reh - rsh + 1, 1)
    bh = np.float32(rh) / np.float32(pooled_h)
    bw = np.float32(rw) / np.float32(pooled_w)
    out = np.zeros((1, C, pooled_h, pooled_w), np.float32)
    for ph in range(pooled_h):
        for pw in range(pooled_w):
            hs = min(max(int(np.floor(np.float32(ph) * bh)) + rsh, 0), H)
            he = min(max(int(np.ceil(np.float32(ph + 1) * bh)) + rsh, 0), H)
            ws = min(max(int(np.floor(np.float32(pw) * bw)) + rsw, 0), W)
            we = min(max(int(np.ceil(np.float32(pw + 1) * bw)) + rsw, 0), W)
            if he <= hs or we <= ws:
                out[0, :, ph, pw] = 0.0
            else:
                out[0, :, ph, pw] = feat[hs:he, ws:we, :].max(axis=(0, 1))
    return out


# ----------------------------------------------------------------------------
# "RoIPoolWithRPNModel" forward (stubbed transform/backbone/RPN + fused Pallas kernel)
# ----------------------------------------------------------------------------
def roipool_with_rpn_forward(images_nchw, conv_w, conv_b, proposal_xyxy, img_height,
                             pooled=7):
    # TODO(synk): pretrained torchvision transform / ResNet50-FPN backbone / RPN
    # cannot be reproduced here; replaced by deterministic space-to-depth + 1x1-conv
    # feature stub and a fixed deterministic proposal box.
    n, cin, ih, iw = images_nchw.shape
    stride = 4
    fh, fw = ih // stride, iw // stride
    x_hwc = jnp.transpose(images_nchw[0], (1, 2, 0))            # (H, W, Cin)
    x_s2d = (
        x_hwc.reshape(fh, stride, fw, stride, cin)
        .transpose(0, 2, 1, 3, 4)
        .reshape(fh * fw, stride * stride * cin)
    )                                                           # (FH*FW, K)
    k_raw = x_s2d.shape[1]
    k_pad = max(128, ((k_raw + 127) // 128) * 128)              # MXU-friendly K
    x_pad = jnp.pad(x_s2d, ((0, 0), (0, k_pad - k_raw)))
    w_pad = jnp.pad(conv_w, ((0, k_pad - k_raw), (0, 0)))
    c = conv_w.shape[1]

    spatial_scale = float(fh) / float(img_height)               # as in forward()
    rois_in_image = jnp.concatenate(
        [jnp.zeros((1,), jnp.float32), proposal_xyxy.astype(jnp.float32)]
    )                                                           # (5,)
    roi_smem = jnp.concatenate(
        [
            rois_in_image,
            jnp.array([spatial_scale], jnp.float32),
            jnp.zeros((2,), jnp.float32),
        ]
    )                                                           # f32[8]

    pooled_slab, feat_flat = fused_feature_roipool(
        x_pad, w_pad, conv_b, roi_smem, FH=fh, FW=fw, C=c, PH=pooled, PW=pooled
    )
    # (PH, PW*C) -> (1, C, PH, PW)  (torch NCHW output convention)
    r = pooled_slab.reshape(pooled, pooled, c).transpose(2, 0, 1)[None]
    third_level_feature = feat_flat.reshape(fh, fw, c)          # layout: HWC
    return r, third_level_feature, rois_in_image, spatial_scale


if __name__ == "__main__":
    key = jax.random.PRNGKey(0)
    k1, k2, k3 = jax.random.split(key, 3)

    # Small, deterministic shapes consistent with the module's forward.
    N, CIN, IMG = 1, 3, 64            # "image" batch (torch NCHW)
    COUT = 128                        # lane-dense stand-in for FPN's 256 channels
    images = jax.random.normal(k1, (N, CIN, IMG, IMG), jnp.float32)

    conv_w = 0.1 * jax.random.normal(k2, (CIN * 16, COUT), jnp.float32)
    conv_b = 0.01 * jax.random.normal(k3, (1, COUT), jnp.float32)

    # Deterministic stand-in for the first RPN proposal (x1, y1, x2, y2).
    proposal = jnp.array([8.0, 4.0, 55.0, 60.0], jnp.float32)

    r, feat, roi, scale = roipool_with_rpn_forward(
        images, conv_w, conv_b, proposal, img_height=IMG
    )
    r = jax.block_until_ready(r)
    assert r.shape == (1, COUT, 7, 7)

    # Exact check of the roi_pool math against a numpy reference on the kernel's
    # own feature map (max pooling is exact, so this is a strict check).
    ref = roi_pool_ref(np.asarray(feat), np.asarray(roi), scale)
    np.testing.assert_allclose(np.asarray(r), ref, rtol=1e-5, atol=1e-5)

    # Loose sanity check of the fused 1x1-conv against numpy f32 (MXU f32 matmul
    # precision can differ slightly from the host).
    fh = fw = IMG // 4
    x_hwc_np = np.transpose(np.asarray(images)[0], (1, 2, 0))
    x_s2d_np = (
        x_hwc_np.reshape(fh, 4, fw, 4, CIN)
        .transpose(0, 2, 1, 3, 4)
        .reshape(fh * fw, 16 * CIN)
    )
    feat_np = x_s2d_np @ np.asarray(conv_w) + np.asarray(conv_b)
    np.testing.assert_allclose(
        np.asarray(feat).reshape(fh * fw, COUT), feat_np, rtol=2e-2, atol=2e-2
    )

    print("KERNEL_OK")
</pallas_src>

<mosaic_0001>
module attributes {stable_mosaic.version = 11 : i64} {
  func.func @_fused_feature_roipool_kernel(%arg0: memref<8xf32, #tpu.memory_space<smem>>, %arg1: memref<256x128xf32, #tpu.memory_space<vmem>>, %arg2: memref<128x128xf32, #tpu.memory_space<vmem>>, %arg3: memref<1x128xf32, #tpu.memory_space<vmem>>, %arg4: memref<7x896xf32, #tpu.memory_space<vmem>>, %arg5: memref<256x128xf32, #tpu.memory_space<vmem>>) attributes {dimension_semantics = [], scalar_prefetch = 0 : i64, scratch_operands = 0 : i64, tpu.core_type = #tpu.core_type<tc>} {
    %c0 = arith.constant 0 : index
    %c0_0 = arith.constant 0 : index
    %0 = vector.load %arg1[%c0, %c0_0] : memref<256x128xf32, #tpu.memory_space<vmem>>, vector<256x128xf32>
    %c0_1 = arith.constant 0 : index
    %c0_2 = arith.constant 0 : index
    %1 = vector.load %arg2[%c0_1, %c0_2] : memref<128x128xf32, #tpu.memory_space<vmem>>, vector<128x128xf32>
    %cst = arith.constant dense<0.000000e+00> : vector<256x128xf32>
    %2 = tpu.matmul %0, %1, %cst {dimension_numbers = #tpu.dot_dimension_numbers<[1], [0], [0], [1], [0, 0, 1, 1], [], []>} : vector<256x128xf32>, vector<128x128xf32>, vector<256x128xf32> -> vector<256x128xf32>
    %c0_3 = arith.constant 0 : index
    %c0_4 = arith.constant 0 : index
    %3 = vector.load %arg3[%c0_3, %c0_4] : memref<1x128xf32, #tpu.memory_space<vmem>>, vector<1x128xf32>
    %4 = vector.broadcast %3 : vector<1x128xf32> to vector<256x128xf32>
    %5 = arith.addf %2, %4 : vector<256x128xf32>
    %c0_5 = arith.constant 0 : index
    %c0_6 = arith.constant 0 : index
    %6 = vector.load %arg5[%c0_5, %c0_6] : memref<256x128xf32, #tpu.memory_space<vmem>>, vector<256x128xf32>
    tpu.vector_store %arg5[%c0_5, %c0_6], %5 {strides = array<i32>} : memref<256x128xf32, #tpu.memory_space<vmem>>, vector<256x128xf32>,
    %7 = vector.shape_cast %5 : vector<256x128xf32> to vector<16x16x128xf32>
    %c5 = arith.constant 5 : index
    %8 = memref.load %arg0[%c5] : memref<8xf32, #tpu.memory_space<smem>>
    %c1 = arith.constant 1 : index
    %9 = memref.load %arg0[%c1] : memref<8xf32, #tpu.memory_space<smem>>
    %10 = arith.mulf %9, %8 : f32
    %cst_7 = arith.constant 5.000000e-01 : f32
    %11 = arith.addf %10, %cst_7 : f32
    %12 = math.floor %11 : f32
    %13 = arith.fptosi %12 : f32 to i32
    %c2 = arith.constant 2 : index
    %14 = memref.load %arg0[%c2] : memref<8xf32, #tpu.memory_space<smem>>
    %15 = arith.mulf %14, %8 : f32
    %cst_8 = arith.constant 5.000000e-01 : f32
    %16 = arith.addf %15, %cst_8 : f32
    %17 = math.floor %16 : f32
    %18 = arith.fptosi %17 : f32 to i32
    %c3 = arith.constant 3 : index
    %19 = memref.load %arg0[%c3] : memref<8xf32, #tpu.memory_space<smem>>
    %20 = arith.mulf %19, %8 : f32
    %cst_9 = arith.constant 5.000000e-01 : f32
    %21 = arith.addf %20, %cst_9 : f32
    %22 = math.floor %21 : f32
    %23 = arith.fptosi %22 : f32 to i32
    %c4 = arith.constant 4 : index
    %24 = memref.load %arg0[%c4] : memref<8xf32, #tpu.memory_space<smem>>
    %25 = arith.mulf %24, %8 : f32
    %cst_10 = arith.constant 5.000000e-01 : f32
    %26 = arith.addf %25, %cst_10 : f32
    %27 = math.floor %26 : f32
    %28 = arith.fptosi %27 : f32 to i32
    %29 = arith.subi %23, %13 : i32
    %c1_i32 = arith.constant 1 : i32
    %30 = arith.addi %29, %c1_i32 : i32
    %c1_i32_11 = arith.constant 1 : i32
    %31 = arith.maxsi %30, %c1_i32_11 : i32
    %32 = arith.subi %28, %18 : i32
    %c1_i32_12 = arith.constant 1 : i32
    %33 = arith.addi %32, %c1_i32_12 : i32
    %c1_i32_13 = arith.constant 1 : i32
    %34 = arith.maxsi %33, %c1_i32_13 : i32
    %35 = arith.sitofp %34 : i32 to f32
    %cst_14 = arith.constant 7.000000e+00 : f32
    %36 = arith.divf %35, %cst_14 : f32
    %37 = arith.sitofp %31 : i32 to f32
    %cst_15 = arith.constant 7.000000e+00 : f32
    %38 = arith.divf %37, %cst_15 : f32
    %39 = tpu.iota {dimensions = array<i32: 1>} : vector<1x16x128xi32>
    %40 = tpu.iota {dimensions = array<i32: 0>} : vector<16x1xi32>
    %cst_16 = arith.constant 0.000000e+00 : f32
    %41 = arith.mulf %cst_16, %38 : f32
    %42 = math.floor %41 : f32
    %43 = arith.fptosi %42 : f32 to i32
    %44 = arith.addi %43, %13 : i32
    %c0_i32 = arith.constant 0 : i32
    %c16_i32 = arith.constant 16 : i32
    %45 = arith.maxsi %c0_i32, %44 : i32
    %46 = arith.minsi %c16_i32, %45 : i32
    %cst_17 = arith.constant 1.000000e+00 : f32
    %47 = arith.mulf %cst_17, %38 : f32
    %48 = math.ceil %47 : f32
    %49 = arith.fptosi %48 : f32 to i32
    %50 = arith.addi %49, %13 : i32
    %c0_i32_18 = arith.constant 0 : i32
    %c16_i32_19 = arith.constant 16 : i32
    %51 = arith.maxsi %c0_i32_18, %50 : i32
    %52 = arith.minsi %c16_i32_19, %51 : i32
    %53 = vector.broadcast %46 : i32 to vector<1x16x128xi32>
    %54 = arith.cmpi sge, %39, %53 : vector<1x16x128xi32>
    %55 = vector.broadcast %52 : i32 to vector<1x16x128xi32>
    %56 = arith.cmpi slt, %39, %55 : vector<1x16x128xi32>
    %57 = arith.andi %54, %56 : vector<1x16x128xi1>
    %cst_20 = arith.constant 0xFF800000 : f32
    %58 = vector.shape_cast %57 : vector<1x16x128xi1> to vector<1x16x128xi1>
    %59 = vector.broadcast %58 : vector<1x16x128xi1> to vector<16x16x128xi1>
    %60 = vector.broadcast %cst_20 : f32 to vector<16x16x128xf32>
    %61 = arith.select %59, %7, %60 : vector<16x16x128xi1>, vector<16x16x128xf32>
    %cst_21 = arith.constant dense<0xFF800000> : vector<16x128xf32>
    %62 = vector.multi_reduction <maximumf>, %61, %cst_21 [1] : vector<16x16x128xf32> to vector<16x128xf32>
    %63 = arith.cmpi sle, %52, %46 : i32
    %cst_22 = arith.constant 0.000000e+00 : f32
    %64 = vector.broadcast %cst_22 : f32 to vector<16x128xf32>
    %65 = arith.select %63, %64, %62 : vector<16x128xf32>
    %cst_23 = arith.constant 1.000000e+00 : f32
    %66 = arith.mulf %cst_23, %38 : f32
    %67 = math.floor %66 : f32
    %68 = arith.fptosi %67 : f32 to i32
    %69 = arith.addi %68, %13 : i32
    %c0_i32_24 = arith.constant 0 : i32
    %c16_i32_25 = arith.constant 16 : i32
    %70 = arith.maxsi %c0_i32_24, %69 : i32
    %71 = arith.minsi %c16_i32_25, %70 : i32
    %cst_26 = arith.constant 2.000000e+00 : f32
    %72 = arith.mulf %cst_26, %38 : f32
    %73 = math.ceil %72 : f32
    %74 = arith.fptosi %73 : f32 to i32
    %75 = arith.addi %74, %13 : i32
    %c0_i32_27 = arith.constant 0 : i32
    %c16_i32_28 = arith.constant 16 : i32
    %76 = arith.maxsi %c0_i32_27, %75 : i32
    %77 = arith.minsi %c16_i32_28, %76 : i32
    %78 = vector.broadcast %71 : i32 to vector<1x16x128xi32>
    %79 = arith.cmpi sge, %39, %78 : vector<1x16x128xi32>
    %80 = vector.broadcast %77 : i32 to vector<1x16x128xi32>
    %81 = arith.cmpi slt, %39, %80 : vector<1x16x128xi32>
    %82 = arith.andi %79, %81 : vector<1x16x128xi1>
    %cst_29 = arith.constant 0xFF800000 : f32
    %83 = vector.shape_cast %82 : vector<1x16x128xi1> to vector<1x16x128xi1>
    %84 = vector.broadcast %83 : vector<1x16x128xi1> to vector<16x16x128xi1>
    %85 = vector.broadcast %cst_29 : f32 to vector<16x16x128xf32>
    %86 = arith.select %84, %7, %85 : vector<16x16x128xi1>, vector<16x16x128xf32>
    %cst_30 = arith.constant dense<0xFF800000> : vector<16x128xf32>
    %87 = vector.multi_reduction <maximumf>, %86, %cst_30 [1] : vector<16x16x128xf32> to vector<16x128xf32>
    %88 = arith.cmpi sle, %77, %71 : i32
    %cst_31 = arith.constant 0.000000e+00 : f32
    %89 = vector.broadcast %cst_31 : f32 to vector<16x128xf32>
    %90 = arith.select %88, %89, %87 : vector<16x128xf32>
    %cst_32 = arith.constant 2.000000e+00 : f32
    %91 = arith.mulf %cst_32, %38 : f32
    %92 = math.floor %91 : f32
    %93 = arith.fptosi %92 : f32 to i32
    %94 = arith.addi %93, %13 : i32
    %c0_i32_33 = arith.constant 0 : i32
    %c16_i32_34 = arith.constant 16 : i32
    %95 = arith.maxsi %c0_i32_33, %94 : i32
    %96 = arith.minsi %c16_i32_34, %95 : i32
    %cst_35 = arith.constant 3.000000e+00 : f32
    %97 = arith.mulf %cst_35, %38 : f32
    %98 = math.ceil %97 : f32
    %99 = arith.fptosi %98 : f32 to i32
    %100 = arith.addi %99, %13 : i32
    %c0_i32_36 = arith.constant 0 : i32
    %c16_i32_37 = arith.constant 16 : i32
    %101 = arith.maxsi %c0_i32_36, %100 : i32
    %102 = arith.minsi %c16_i32_37, %101 : i32
    %103 = vector.broadcast %96 : i32 to vector<1x16x128xi32>
    %104 = arith.cmpi sge, %39, %103 : vector<1x16x128xi32>
    %105 = vector.broadcast %102 : i32 to vector<1x16x128xi32>
    %106 = arith.cmpi slt, %39, %105 : vector<1x16x128xi32>
    %107 = arith.andi %104, %106 : vector<1x16x128xi1>
    %cst_38 = arith.constant 0xFF800000 : f32
    %108 = vector.shape_cast %107 : vector<1x16x128xi1> to vector<1x16x128xi1>
    %109 = vector.broadcast %108 : vector<1x16x128xi1> to vector<16x16x128xi1>
    %110 = vector.broadcast %cst_38 : f32 to vector<16x16x128xf32>
    %111 = arith.select %109, %7, %110 : vector<16x16x128xi1>, vector<16x16x128xf32>
    %cst_39 = arith.constant dense<0xFF800000> : vector<16x128xf32>
    %112 = vector.multi_reduction <maximumf>, %111, %cst_39 [1] : vector<16x16x128xf32> to vector<16x128xf32>
    %113 = arith.cmpi sle, %102, %96 : i32
    %cst_40 = arith.constant 0.000000e+00 : f32
    %114 = vector.broadcast %cst_40 : f32 to vector<16x128xf32>
    %115 = arith.select %113, %114, %112 : vector<16x128xf32>
    %cst_41 = arith.constant 3.000000e+00 : f32
    %116 = arith.mulf %cst_41, %38 : f32
    %117 = math.floor %116 : f32
    %118 = arith.fptosi %117 : f32 to i32
    %119 = arith.addi %118, %13 : i32
    %c0_i32_42 = arith.constant 0 : i32
    %c16_i32_43 = arith.constant 16 : i32
    %120 = arith.maxsi %c0_i32_42, %119 : i32
    %121 = arith.minsi %c16_i32_43, %120 : i32
    %cst_44 = arith.constant 4.000000e+00 : f32
    %122 = arith.mulf %cst_44, %38 : f32
    %123 = math.ceil %122 : f32
    %124 = arith.fptosi %123 : f32 to i32
    %125 = arith.addi %124, %13 : i32
    %c0_i32_45 = arith.constant 0 : i32
    %c16_i32_46 = arith.constant 16 : i32
    %126 = arith.maxsi %c0_i32_45, %125 : i32
    %127 = arith.minsi %c16_i32_46, %126 : i32
    %128 = vector.broadcast %121 : i32 to vector<1x16x128xi32>
    %129 = arith.cmpi sge, %39, %128 : vector<1x16x128xi32>
    %130 = vector.broadcast %127 : i32 to vector<1x16x128xi32>
    %131 = arith.cmpi slt, %39, %130 : vector<1x16x128xi32>
    %132 = arith.andi %129, %131 : vector<1x16x128xi1>
    %cst_47 = arith.constant 0xFF800000 : f32
    %133 = vector.shape_cast %132 : vector<1x16x128xi1> to vector<1x16x128xi1>
    %134 = vector.broadcast %133 : vector<1x16x128xi1> to vector<16x16x128xi1>
    %135 = vector.broadcast %cst_47 : f32 to vector<16x16x128xf32>
    %136 = arith.select %134, %7, %135 : vector<16x16x128xi1>, vector<16x16x128xf32>
    %cst_48 = arith.constant dense<0xFF800000> : vector<16x128xf32>
    %137 = vector.multi_reduction <maximumf>, %136, %cst_48 [1] : vector<16x16x128xf32> to vector<16x128xf32>
    %138 = arith.cmpi sle, %127, %121 : i32
    %cst_49 = arith.constant 0.000000e+00 : f32
    %139 = vector.broadcast %cst_49 : f32 to vector<16x128xf32>
    %140 = arith.select %138, %139, %137 : vector<16x128xf32>
    %cst_50 = arith.constant 4.000000e+00 : f32
    %141 = arith.mulf %cst_50, %38 : f32
    %142 = math.floor %141 : f32
    %143 = arith.fptosi %142 : f32 to i32
    %144 = arith.addi %143, %13 : i32
    %c0_i32_51 = arith.constant 0 : i32
    %c16_i32_52 = arith.constant 16 : i32
    %145 = arith.maxsi %c0_i32_51, %144 : i32
    %146 = arith.minsi %c16_i32_52, %145 : i32
    %cst_53 = arith.constant 5.000000e+00 : f32
    %147 = arith.mulf %cst_53, %38 : f32
    %148 = math.ceil %147 : f32
    %149 = arith.fptosi %148 : f32 to i32
    %150 = arith.addi %149, %13 : i32
    %c0_i32_54 = arith.constant 0 : i32
    %c16_i32_55 = arith.constant 16 : i32
    %151 = arith.maxsi %c0_i32_54, %150 : i32
    %152 = arith.minsi %c16_i32_55, %151 : i32
    %153 = vector.broadcast %146 : i32 to vector<1x16x128xi32>
    %154 = arith.cmpi sge, %39, %153 : vector<1x16x128xi32>
    %155 = vector.broadcast %152 : i32 to vector<1x16x128xi32>
    %156 = arith.cmpi slt, %39, %155 : vector<1x16x128xi32>
    %157 = arith.andi %154, %156 : vector<1x16x128xi1>
    %cst_56 = arith.constant 0xFF800000 : f32
    %158 = vector.shape_cast %157 : vector<1x16x128xi1> to vector<1x16x128xi1>
    %159 = vector.broadcast %158 : vector<1x16x128xi1> to vector<16x16x128xi1>
    %160 = vector.broadcast %cst_56 : f32 to vector<16x16x128xf32>
    %161 = arith.select %159, %7, %160 : vector<16x16x128xi1>, vector<16x16x128xf32>
    %cst_57 = arith.constant dense<0xFF800000> : vector<16x128xf32>
    %162 = vector.multi_reduction <maximumf>, %161, %cst_57 [1] : vector<16x16x128xf32> to vector<16x128xf32>
    %163 = arith.cmpi sle, %152, %146 : i32
    %cst_58 = arith.constant 0.000000e+00 : f32
    %164 = vector.broadcast %cst_58 : f32 to vector<16x128xf32>
    %165 = arith.select %163, %164, %162 : vector<16x128xf32>
    %cst_59 = arith.constant 5.000000e+00 : f32
    %166 = arith.mulf %cst_59, %38 : f32
    %167 = math.floor %166 : f32
    %168 = arith.fptosi %167 : f32 to i32
    %169 = arith.addi %168, %13 : i32
    %c0_i32_60 = arith.constant 0 : i32
    %c16_i32_61 = arith.constant 16 : i32
    %170 = arith.maxsi %c0_i32_60, %169 : i32
    %171 = arith.minsi %c16_i32_61, %170 : i32
    %cst_62 = arith.constant 6.000000e+00 : f32
    %172 = arith.mulf %cst_62, %38 : f32
    %173 = math.ceil %172 : f32
    %174 = arith.fptosi %173 : f32 to i32
    %175 = arith.addi %174, %13 : i32
    %c0_i32_63 = arith.constant 0 : i32
    %c16_i32_64 = arith.constant 16 : i32
    %176 = arith.maxsi %c0_i32_63, %175 : i32
    %177 = arith.minsi %c16_i32_64, %176 : i32
    %178 = vector.broadcast %171 : i32 to vector<1x16x128xi32>
    %179 = arith.cmpi sge, %39, %178 : vector<1x16x128xi32>
    %180 = vector.broadcast %177 : i32 to vector<1x16x128xi32>
    %181 = arith.cmpi slt, %39, %180 : vector<1x16x128xi32>
    %182 = arith.andi %179, %181 : vector<1x16x128xi1>
    %cst_65 = arith.constant 0xFF800000 : f32
    %183 = vector.shape_cast %182 : vector<1x16x128xi1> to vector<1x16x128xi1>
    %184 = vector.broadcast %183 : vector<1x16x128xi1> to vector<16x16x128xi1>
    %185 = vector.broadcast %cst_65 : f32 to vector<16x16x128xf32>
    %186 = arith.select %184, %7, %185 : vector<16x16x128xi1>, vector<16x16x128xf32>
    %cst_66 = arith.constant dense<0xFF800000> : vector<16x128xf32>
    %187 = vector.multi_reduction <maximumf>, %186, %cst_66 [1] : vector<16x16x128xf32> to vector<16x128xf32>
    %188 = arith.cmpi sle, %177, %171 : i32
    %cst_67 = arith.constant 0.000000e+00 : f32
    %189 = vector.broadcast %cst_67 : f32 to vector<16x128xf32>
    %190 = arith.select %188, %189, %187 : vector<16x128xf32>
    %cst_68 = arith.constant 6.000000e+00 : f32
    %191 = arith.mulf %cst_68, %38 : f32
    %192 = math.floor %191 : f32
    %193 = arith.fptosi %192 : f32 to i32
    %194 = arith.addi %193, %13 : i32
    %c0_i32_69 = arith.constant 0 : i32
    %c16_i32_70 = arith.constant 16 : i32
    %195 = arith.maxsi %c0_i32_69, %194 : i32
    %196 = arith.minsi %c16_i32_70, %195 : i32
    %cst_71 = arith.constant 7.000000e+00 : f32
    %197 = arith.mulf %cst_71, %38 : f32
    %198 = math.ceil %197 : f32
    %199 = arith.fptosi %198 : f32 to i32
    %200 = arith.addi %199, %13 : i32
    %c0_i32_72 = arith.constant 0 : i32
    %c16_i32_73 = arith.constant 16 : i32
    %201 = arith.maxsi %c0_i32_72, %200 : i32
    %202 = arith.minsi %c16_i32_73, %201 : i32
    %203 = vector.broadcast %196 : i32 to vector<1x16x128xi32>
    %204 = arith.cmpi sge, %39, %203 : vector<1x16x128xi32>
    %205 = vector.broadcast %202 : i32 to vector<1x16x128xi32>
    %206 = arith.cmpi slt, %39, %205 : vector<1x16x128xi32>
    %207 = arith.andi %204, %206 : vector<1x16x128xi1>
    %cst_74 = arith.constant 0xFF800000 : f32
    %208 = vector.shape_cast %207 : vector<1x16x128xi1> to vector<1x16x128xi1>
    %209 = vector.broadcast %208 : vector<1x16x128xi1> to vector<16x16x128xi1>
    %210 = vector.broadcast %cst_74 : f32 to vector<16x16x128xf32>
    %211 = arith.select %209, %7, %210 : vector<16x16x128xi1>, vector<16x16x128xf32>
    %cst_75 = arith.constant dense<0xFF800000> : vector<16x128xf32>
    %212 = vector.multi_reduction <maximumf>, %211, %cst_75 [1] : vector<16x16x128xf32> to vector<16x128xf32>
    %213 = arith.cmpi sle, %202, %196 : i32
    %cst_76 = arith.constant 0.000000e+00 : f32
    %214 = vector.broadcast %cst_76 : f32 to vector<16x128xf32>
    %215 = arith.select %213, %214, %212 : vector<16x128xf32>
    %216 = tpu.concatenate %65, %90, %115, %140, %165, %190, %215 in 1 : vector<16x128xf32>, vector<16x128xf32>, vector<16x128xf32>, vector<16x128xf32>, vector<16x128xf32>, vector<16x128xf32>, vector<16x128xf32> -> vector<16x896xf32>
    %cst_77 = arith.constant 0.000000e+00 : f32
    %217 = arith.mulf %cst_77, %36 : f32
    %218 = math.floor %217 : f32
    %219 = arith.fptosi %218 : f32 to i32
    %220 = arith.addi %219, %18 : i32
    %c0_i32_78 = arith.constant 0 : i32
    %c16_i32_79 = arith.constant 16 : i32
    %221 = arith.maxsi %c0_i32_78, %220 : i32
    %222 = arith.minsi %c16_i32_79, %221 : i32
    %cst_80 = arith.constant 1.000000e+00 : f32
    %223 = arith.mulf %cst_80, %36 : f32
    %224 = math.ceil %223 : f32
    %225 = arith.fptosi %224 : f32 to i32
    %226 = arith.addi %225, %18 : i32
    %c0_i32_81 = arith.constant 0 : i32
    %c16_i32_82 = arith.constant 16 : i32
    %227 = arith.maxsi %c0_i32_81, %226 : i32
    %228 = arith.minsi %c16_i32_82, %227 : i32
    %229 = vector.broadcast %222 : i32 to vector<16x1xi32>
    %230 = arith.cmpi sge, %40, %229 : vector<16x1xi32>
    %231 = vector.broadcast %228 : i32 to vector<16x1xi32>
    %232 = arith.cmpi slt, %40, %231 : vector<16x1xi32>
    %233 = arith.andi %230, %232 : vector<16x1xi1>
    %cst_83 = arith.constant 0xFF800000 : f32
    %234 = vector.shape_cast %233 : vector<16x1xi1> to vector<16x1xi1>
    %235 = vector.broadcast %234 : vector<16x1xi1> to vector<16x896xi1>
    %236 = vector.broadcast %cst_83 : f32 to vector<16x896xf32>
    %237 = arith.select %235, %216, %236 : vector<16x896xi1>, vector<16x896xf32>
    %cst_84 = arith.constant dense<0xFF800000> : vector<896xf32>
    %238 = vector.multi_reduction <maximumf>, %237, %cst_84 [0] : vector<16x896xf32> to vector<896xf32>
    %239 = vector.shape_cast %238 : vector<896xf32> to vector<1x896xf32>
    %240 = arith.cmpi sle, %228, %222 : i32
    %cst_85 = arith.constant 0.000000e+00 : f32
    %241 = vector.broadcast %cst_85 : f32 to vector<1x896xf32>
    %242 = arith.select %240, %241, %239 : vector<1x896xf32>
    %cst_86 = arith.constant 1.000000e+00 : f32
    %243 = arith.mulf %cst_86, %36 : f32
    %244 = math.floor %243 : f32
    %245 = arith.fptosi %244 : f32 to i32
    %246 = arith.addi %245, %18 : i32
    %c0_i32_87 = arith.constant 0 : i32
    %c16_i32_88 = arith.constant 16 : i32
    %247 = arith.maxsi %c0_i32_87, %246 : i32
    %248 = arith.minsi %c16_i32_88, %247 : i32
    %cst_89 = arith.constant 2.000000e+00 : f32
    %249 = arith.mulf %cst_89, %36 : f32
    %250 = math.ceil %249 : f32
    %251 = arith.fptosi %250 : f32 to i32
    %252 = arith.addi %251, %18 : i32
    %c0_i32_90 = arith.constant 0 : i32
    %c16_i32_91 = arith.constant 16 : i32
    %253 = arith.maxsi %c0_i32_90, %252 : i32
    %254 = arith.minsi %c16_i32_91, %253 : i32
    %255 = vector.broadcast %248 : i32 to vector<16x1xi32>
    %256 = arith.cmpi sge, %40, %255 : vector<16x1xi32>
    %257 = vector.broadcast %254 : i32 to vector<16x1xi32>
    %258 = arith.cmpi slt, %40, %257 : vector<16x1xi32>
    %259 = arith.andi %256, %258 : vector<16x1xi1>
    %cst_92 = arith.constant 0xFF800000 : f32
    %260 = vector.shape_cast %259 : vector<16x1xi1> to vector<16x1xi1>
    %261 = vector.broadcast %260 : vector<16x1xi1> to vector<16x896xi1>
    %262 = vector.broadcast %cst_92 : f32 to vector<16x896xf32>
    %263 = arith.select %261, %216, %262 : vector<16x896xi1>, vector<16x896xf32>
    %cst_93 = arith.constant dense<0xFF800000> : vector<896xf32>
    %264 = vector.multi_reduction <maximumf>, %263, %cst_93 [0] : vector<16x896xf32> to vector<896xf32>
    %265 = vector.shape_cast %264 : vector<896xf32> to vector<1x896xf32>
    %266 = arith.cmpi sle, %254, %248 : i32
    %cst_94 = arith.constant 0.000000e+00 : f32
    %267 = vector.broadcast %cst_94 : f32 to vector<1x896xf32>
    %268 = arith.select %266, %267, %265 : vector<1x896xf32>
    %cst_95 = arith.constant 2.000000e+00 : f32
    %269 = arith.mulf %cst_95, %36 : f32
    %270 = math.floor %269 : f32
    %271 = arith.fptosi %270 : f32 to i32
    %272 = arith.addi %271, %18 : i32
    %c0_i32_96 = arith.constant 0 : i32
    %c16_i32_97 = arith.constant 16 : i32
    %273 = arith.maxsi %c0_i32_96, %272 : i32
    %274 = arith.minsi %c16_i32_97, %273 : i32
    %cst_98 = arith.constant 3.000000e+00 : f32
    %275 = arith.mulf %cst_98, %36 : f32
    %276 = math.ceil %275 : f32
    %277 = arith.fptosi %276 : f32 to i32
    %278 = arith.addi %277, %18 : i32
    %c0_i32_99 = arith.constant 0 : i32
    %c16_i32_100 = arith.constant 16 : i32
    %279 = arith.maxsi %c0_i32_99, %278 : i32
    %280 = arith.minsi %c16_i32_100, %279 : i32
    %281 = vector.broadcast %274 : i32 to vector<16x1xi32>
    %282 = arith.cmpi sge, %40, %281 : vector<16x1xi32>
    %283 = vector.broadcast %280 : i32 to vector<16x1xi32>
    %284 = arith.cmpi slt, %40, %283 : vector<16x1xi32>
    %285 = arith.andi %282, %284 : vector<16x1xi1>
    %cst_101 = arith.constant 0xFF800000 : f32
    %286 = vector.shape_cast %285 : vector<16x1xi1> to vector<16x1xi1>
    %287 = vector.broadcast %286 : vector<16x1xi1> to vector<16x896xi1>
    %288 = vector.broadcast %cst_101 : f32 to vector<16x896xf32>
    %289 = arith.select %287, %216, %288 : vector<16x896xi1>, vector<16x896xf32>
    %cst_102 = arith.constant dense<0xFF800000> : vector<896xf32>
    %290 = vector.multi_reduction <maximumf>, %289, %cst_102 [0] : vector<16x896xf32> to vector<896xf32>
    %291 = vector.shape_cast %290 : vector<896xf32> to vector<1x896xf32>
    %292 = arith.cmpi sle, %280, %274 : i32
    %cst_103 = arith.constant 0.000000e+00 : f32
    %293 = vector.broadcast %cst_103 : f32 to vector<1x896xf32>
    %294 = arith.select %292, %293, %291 : vector<1x896xf32>
    %cst_104 = arith.constant 3.000000e+00 : f32
    %295 = arith.mulf %cst_104, %36 : f32
    %296 = math.floor %295 : f32
    %297 = arith.fptosi %296 : f32 to i32
    %298 = arith.addi %297, %18 : i32
    %c0_i32_105 = arith.constant 0 : i32
    %c16_i32_106 = arith.constant 16 : i32
    %299 = arith.maxsi %c0_i32_105, %298 : i32
    %300 = arith.minsi %c16_i32_106, %299 : i32
    %cst_107 = arith.constant 4.000000e+00 : f32
    %301 = arith.mulf %cst_107, %36 : f32
    %302 = math.ceil %301 : f32
    %303 = arith.fptosi %302 : f32 to i32
    %304 = arith.addi %303, %18 : i32
    %c0_i32_108 = arith.constant 0 : i32
    %c16_i32_109 = arith.constant 16 : i32
    %305 = arith.maxsi %c0_i32_108, %304 : i32
    %306 = arith.minsi %c16_i32_109, %305 : i32
    %307 = vector.broadcast %300 : i32 to vector<16x1xi32>
    %308 = arith.cmpi sge, %40, %307 : vector<16x1xi32>
    %309 = vector.broadcast %306 : i32 to vector<16x1xi32>
    %310 = arith.cmpi slt, %40, %309 : vector<16x1xi32>
    %311 = arith.andi %308, %310 : vector<16x1xi1>
    %cst_110 = arith.constant 0xFF800000 : f32
    %312 = vector.shape_cast %311 : vector<16x1xi1> to vector<16x1xi1>
    %313 = vector.broadcast %312 : vector<16x1xi1> to vector<16x896xi1>
    %314 = vector.broadcast %cst_110 : f32 to vector<16x896xf32>
    %315 = arith.select %313, %216, %314 : vector<16x896xi1>, vector<16x896xf32>
    %cst_111 = arith.constant dense<0xFF800000> : vector<896xf32>
    %316 = vector.multi_reduction <maximumf>, %315, %cst_111 [0] : vector<16x896xf32> to vector<896xf32>
    %317 = vector.shape_cast %316 : vector<896xf32> to vector<1x896xf32>
    %318 = arith.cmpi sle, %306, %300 : i32
    %cst_112 = arith.constant 0.000000e+00 : f32
    %319 = vector.broadcast %cst_112 : f32 to vector<1x896xf32>
    %320 = arith.select %318, %319, %317 : vector<1x896xf32>
    %cst_113 = arith.constant 4.000000e+00 : f32
    %321 = arith.mulf %cst_113, %36 : f32
    %322 = math.floor %321 : f32
    %323 = arith.fptosi %322 : f32 to i32
    %324 = arith.addi %323, %18 : i32
    %c0_i32_114 = arith.constant 0 : i32
    %c16_i32_115 = arith.constant 16 : i32
    %325 = arith.maxsi %c0_i32_114, %324 : i32
    %326 = arith.minsi %c16_i32_115, %325 : i32
    %cst_116 = arith.constant 5.000000e+00 : f32
    %327 = arith.mulf %cst_116, %36 : f32
    %328 = math.ceil %327 : f32
    %329 = arith.fptosi %328 : f32 to i32
    %330 = arith.addi %329, %18 : i32
    %c0_i32_117 = arith.constant 0 : i32
    %c16_i32_118 = arith.constant 16 : i32
    %331 = arith.maxsi %c0_i32_117, %330 : i32
    %332 = arith.minsi %c16_i32_118, %331 : i32
    %333 = vector.broadcast %326 : i32 to vector<16x1xi32>
    %334 = arith.cmpi sge, %40, %333 : vector<16x1xi32>
    %335 = vector.broadcast %332 : i32 to vector<16x1xi32>
    %336 = arith.cmpi slt, %40, %335 : vector<16x1xi32>
    %337 = arith.andi %334, %336 : vector<16x1xi1>
    %cst_119 = arith.constant 0xFF800000 : f32
    %338 = vector.shape_cast %337 : vector<16x1xi1> to vector<16x1xi1>
    %339 = vector.broadcast %338 : vector<16x1xi1> to vector<16x896xi1>
    %340 = vector.broadcast %cst_119 : f32 to vector<16x896xf32>
    %341 = arith.select %339, %216, %340 : vector<16x896xi1>, vector<16x896xf32>
    %cst_120 = arith.constant dense<0xFF800000> : vector<896xf32>
    %342 = vector.multi_reduction <maximumf>, %341, %cst_120 [0] : vector<16x896xf32> to vector<896xf32>
    %343 = vector.shape_cast %342 : vector<896xf32> to vector<1x896xf32>
    %344 = arith.cmpi sle, %332, %326 : i32
    %cst_121 = arith.constant 0.000000e+00 : f32
    %345 = vector.broadcast %cst_121 : f32 to vector<1x896xf32>
    %346 = arith.select %344, %345, %343 : vector<1x896xf32>
    %cst_122 = arith.constant 5.000000e+00 : f32
    %347 = arith.mulf %cst_122, %36 : f32
    %348 = math.floor %347 : f32
    %349 = arith.fptosi %348 : f32 to i32
    %350 = arith.addi %349, %18 : i32
    %c0_i32_123 = arith.constant 0 : i32
    %c16_i32_124 = arith.constant 16 : i32
    %351 = arith.maxsi %c0_i32_123, %350 : i32
    %352 = arith.minsi %c16_i32_124, %351 : i32
    %cst_125 = arith.constant 6.000000e+00 : f32
    %353 = arith.mulf %cst_125, %36 : f32
    %354 = math.ceil %353 : f32
    %355 = arith.fptosi %354 : f32 to i32
    %356 = arith.addi %355, %18 : i32
    %c0_i32_126 = arith.constant 0 : i32
    %c16_i32_127 = arith.constant 16 : i32
    %357 = arith.maxsi %c0_i32_126, %356 : i32
    %358 = arith.minsi %c16_i32_127, %357 : i32
    %359 = vector.broadcast %352 : i32 to vector<16x1xi32>
    %360 = arith.cmpi sge, %40, %359 : vector<16x1xi32>
    %361 = vector.broadcast %358 : i32 to vector<16x1xi32>
    %362 = arith.cmpi slt, %40, %361 : vector<16x1xi32>
    %363 = arith.andi %360, %362 : vector<16x1xi1>
    %cst_128 = arith.constant 0xFF800000 : f32
    %364 = vector.shape_cast %363 : vector<16x1xi1> to vector<16x1xi1>
    %365 = vector.broadcast %364 : vector<16x1xi1> to vector<16x896xi1>
    %366 = vector.broadcast %cst_128 : f32 to vector<16x896xf32>
    %367 = arith.select %365, %216, %366 : vector<16x896xi1>, vector<16x896xf32>
    %cst_129 = arith.constant dense<0xFF800000> : vector<896xf32>
    %368 = vector.multi_reduction <maximumf>, %367, %cst_129 [0] : vector<16x896xf32> to vector<896xf32>
    %369 = vector.shape_cast %368 : vector<896xf32> to vector<1x896xf32>
    %370 = arith.cmpi sle, %358, %352 : i32
    %cst_130 = arith.constant 0.000000e+00 : f32
    %371 = vector.broadcast %cst_130 : f32 to vector<1x896xf32>
    %372 = arith.select %370, %371, %369 : vector<1x896xf32>
    %cst_131 = arith.constant 6.000000e+00 : f32
    %373 = arith.mulf %cst_131, %36 : f32
    %374 = math.floor %373 : f32
    %375 = arith.fptosi %374 : f32 to i32
    %376 = arith.addi %375, %18 : i32
    %c0_i32_132 = arith.constant 0 : i32
    %c16_i32_133 = arith.constant 16 : i32
    %377 = arith.maxsi %c0_i32_132, %376 : i32
    %378 = arith.minsi %c16_i32_133, %377 : i32
    %cst_134 = arith.constant 7.000000e+00 : f32
    %379 = arith.mulf %cst_134, %36 : f32
    %380 = math.ceil %379 : f32
    %381 = arith.fptosi %380 : f32 to i32
    %382 = arith.addi %381, %18 : i32
    %c0_i32_135 = arith.constant 0 : i32
    %c16_i32_136 = arith.constant 16 : i32
    %383 = arith.maxsi %c0_i32_135, %382 : i32
    %384 = arith.minsi %c16_i32_136, %383 : i32
    %385 = vector.broadcast %378 : i32 to vector<16x1xi32>
    %386 = arith.cmpi sge, %40, %385 : vector<16x1xi32>
    %387 = vector.broadcast %384 : i32 to vector<16x1xi32>
    %388 = arith.cmpi slt, %40, %387 : vector<16x1xi32>
    %389 = arith.andi %386, %388 : vector<16x1xi1>
    %cst_137 = arith.constant 0xFF800000 : f32
    %390 = vector.shape_cast %389 : vector<16x1xi1> to vector<16x1xi1>
    %391 = vector.broadcast %390 : vector<16x1xi1> to vector<16x896xi1>
    %392 = vector.broadcast %cst_137 : f32 to vector<16x896xf32>
    %393 = arith.select %391, %216, %392 : vector<16x896xi1>, vector<16x896xf32>
    %cst_138 = arith.constant dense<0xFF800000> : vector<896xf32>
    %394 = vector.multi_reduction <maximumf>, %393, %cst_138 [0] : vector<16x896xf32> to vector<896xf32>
    %395 = vector.shape_cast %394 : vector<896xf32> to vector<1x896xf32>
    %396 = arith.cmpi sle, %384, %378 : i32
    %cst_139 = arith.constant 0.000000e+00 : f32
    %397 = vector.broadcast %cst_139 : f32 to vector<1x896xf32>
    %398 = arith.select %396, %397, %395 : vector<1x896xf32>
    %399 = tpu.concatenate %242, %268, %294, %320, %346, %372, %398 in 0 : vector<1x896xf32>, vector<1x896xf32>, vector<1x896xf32>, vector<1x896xf32>, vector<1x896xf32>, vector<1x896xf32>, vector<1x896xf32> -> vector<7x896xf32>
    %c0_140 = arith.constant 0 : index
    %c0_141 = arith.constant 0 : index
    %400 = vector.load %arg4[%c0_140, %c0_141] : memref<7x896xf32, #tpu.memory_space<vmem>>, vector<7x896xf32>
    tpu.vector_store %arg4[%c0_140, %c0_141], %399 {strides = array<i32>} : memref<7x896xf32, #tpu.memory_space<vmem>>, vector<7x896xf32>,
    return
  }
}

</mosaic_0001>

<llo_original>
// kernel: tpu_custom_call.1
$region0: #{tpu_custom_call.1}
  #allocation0 [shape = 'u32[]', space=smem, size = 0x4, offset = 0x4, fixed_abs, tag = 'smem constant byte address 0x4 - core index']
  #allocation1 [shape = 'u32[72,128]{1,0:T(1,128)}', space=vmem, size = 0x9000, scoped, tag = 'internal scratch']
  %s0 = inlined_call_operand.hbm [shape: f32[8], index: 0, kind: input, shape index: {}]
  %s1 = inlined_call_operand.hbm [shape: f32[256,128], index: 1, kind: input, shape index: {}]
  %s2 = inlined_call_operand.hbm [shape: f32[128,128], index: 2, kind: input, shape index: {}]
  %s3 = inlined_call_operand.vmem [shape: f32[1,128], index: 3, kind: input, shape index: {}]
  %s4 = inlined_call_operand.hbm [shape: f32[7,896], index: 4, kind: output, shape index: {0}]
  %s5 = inlined_call_operand.hbm [shape: f32[256,128], index: 5, kind: output, shape index: {1}]
  %6 = xla_tuple %s4, %s5
  %s7 = sld [smem:[#allocation0]]
  $region46: #{tpu_custom_call.1} parent=0
    _
  %s9 = ssub.s32 1, %s7
  %s10 = scalar_select 0, %s9, %s7
  $region1: #{tpu_custom_call.1} parent=0
    #allocation2 [shape = 'u8[512]{0}', space=smem, size = 0x200, scoped, tag = 'input window, operand 0, single buffered']
    #allocation3 [shape = 's32[1]{0}', space=sflag, size = 0x4, scoped, tag = 'scoped memory for tpu_custom_call.1']
    #allocation4 [shape = 's32[1]{0}', space=sflag, size = 0x4, scoped, tag = 'scoped memory for tpu_custom_call.1']
    #allocation5 [shape = 's32[1]{0}', space=sflag, size = 0x4, scoped, tag = 'scoped memory for tpu_custom_call.1']
    #allocation6 [shape = 'u8[131072]{0}', space=vmem, size = 0x20000, scoped, tag = 'input window, operand 1, single buffered']
    #allocation7 [shape = 'u8[65536]{0}', space=vmem, size = 0x10000, scoped, tag = 'input window, operand 2, single buffered']
    #allocation8 [shape = 's32[1]{0}', space=sflag, size = 0x4, scoped, tag = 'scoped memory for tpu_custom_call.1']
    #allocation9 [shape = 'u8[28672]{0}', space=vmem, size = 0x7000, scoped, tag = 'output window, operand 0, single buffered']
    #allocation10 [shape = 'u8[131072]{0}', space=vmem, size = 0x20000, scoped, tag = 'output window, operand 1, single buffered']
    #allocation11 [shape = 's32[1]{0}', space=sflag, size = 0x4, scoped, tag = 'scoped memory for tpu_custom_call.1']
    %11 = vsyncpa [#allocation5], 0
    %12 = vsyncpa [#allocation3], 0
    %13 = vsyncpa [#allocation8], 0
    %14 = vsyncpa [#allocation4], 0
    %15 = vsyncpa [#allocation11], 0
    // Predicated region
    $region2: #{tpu_custom_call.1} parent=1 // pred_check
      _
    $region3: #{tpu_custom_call.1} parent=1 // pred_check_branch
      %17 = sbr.rel (0) target = $region5
    $region4: #{tpu_custom_call.1} parent=1 // pred_region
      %19 = vsyncadd [#allocation5], 0
      %s21 = sshll.u32 %s0, 4
      %s22 = int_to_ptr.hbm [resolvable:$true] %s21
      %24 = dma.hbm_to_smem %s22, 16, [#allocation2], [#allocation5]
    $region5: #{tpu_custom_call.1} parent=1 // pred_fallthru
      _
    // Predicated region
    $region6: #{tpu_custom_call.1} parent=1 // pred_check
      _
    $region7: #{tpu_custom_call.1} parent=1 // pred_check_branch
      %26 = sbr.rel (0) target = $region9
    $region8: #{tpu_custom_call.1} parent=1 // pred_region
      %28 = vsyncadd [#allocation3], 0
      %s29 = sshll.u32 %s1, 4
      %s30 = int_to_ptr.hbm [resolvable:$true] %s29
      %s31 = sshll.u32 [#allocation6], 4
      %s32 = int_to_ptr.vmem [resolvable:$true] %s31
      %37 = dma.hbm_to_vmem [thread:$0]  %s30, 4096, %s32, [#allocation3], 128, 128, 8
    $region9: #{tpu_custom_call.1} parent=1 // pred_fallthru
      _
    // Predicated region
    $region10: #{tpu_custom_call.1} parent=1 // pred_check
      _
    $region11: #{tpu_custom_call.1} parent=1 // pred_check_branch
      %39 = sbr.rel (0) target = $region13
    $region12: #{tpu_custom_call.1} parent=1 // pred_region
      %41 = vsyncadd [#allocation8], 0
      %s42 = sshll.u32 %s2, 4
      %s43 = int_to_ptr.hbm [resolvable:$true] %s42
      %s44 = sshll.u32 [#allocation7], 4
      %s45 = int_to_ptr.vmem [resolvable:$true] %s44
      %50 = dma.hbm_to_vmem [thread:$0]  %s43, 2048, %s45, [#allocation8], 128, 128, 8
    $region13: #{tpu_custom_call.1} parent=1 // pred_fallthru
      _
    // Predicated region
    $region14: #{tpu_custom_call.1} parent=1 // pred_check
      _
    $region15: #{tpu_custom_call.1} parent=1 // pred_check_branch
      %52 = sbr.rel (0) target = $region17
    $region16: #{tpu_custom_call.1} parent=1 // pred_region
      _
    $region17: #{tpu_custom_call.1} parent=1 // pred_fallthru
      _
    // Predicated region
    $region18: #{tpu_custom_call.1} parent=1 // pred_check
      _
    $region19: #{tpu_custom_call.1} parent=1 // pred_check_branch
      %54 = sbr.rel (0) target = $region21
    $region20: #{tpu_custom_call.1} parent=1 // pred_region
      %56 = dma.done [#allocation5], 16
    $region21: #{tpu_custom_call.1} parent=1 // pred_fallthru
      _
    // Predicated region
    $region22: #{tpu_custom_call.1} parent=1 // pred_check
      _
    $region23: #{tpu_custom_call.1} parent=1 // pred_check_branch
      %58 = sbr.rel (0) target = $region25
    $region24: #{tpu_custom_call.1} parent=1 // pred_region
      %60 = dma.done [#allocation3], 4096
    $region25: #{tpu_custom_call.1} parent=1 // pred_fallthru
      _
    // Predicated region
    $region26: #{tpu_custom_call.1} parent=1 // pred_check
      _
    $region27: #{tpu_custom_call.1} parent=1 // pred_check_branch
      %62 = sbr.rel (0) target = $region29
    $region28: #{tpu_custom_call.1} parent=1 // pred_region
      %64 = dma.done [#allocation8], 2048
    $region29: #{tpu_custom_call.1} parent=1 // pred_fallthru
      _
    %65 = sfence
    %v66 = vld [vmem:[#allocation6] sm:$0xff]
    %v67 = vld [vmem:[#allocation6 + $0x8] sm:$0xff]
    %v68 = vld [vmem:[#allocation6 + $0x10] sm:$0xff]
    %v69 = vld [vmem:[#allocation6 + $0x18] sm:$0xff]
    %v70 = vld [vmem:[#allocation6 + $0x20] sm:$0xff]
    %v71 = vld [vmem:[#allocation6 + $0x28] sm:$0xff]
    %v72 = vld [vmem:[#allocation6 + $0x30] sm:$0xff]
    %v73 = vld [vmem:[#allocation6 + $0x38] sm:$0xff]
    %v74 = vld [vmem:[#allocation6 + $0x40] sm:$0xff]
    %v75 = vld [vmem:[#allocation6 + $0x48] sm:$0xff]
    %v76 = vld [vmem:[#allocation6 + $0x50] sm:$0xff]
    %v77 = vld [vmem:[#allocation6 + $0x58] sm:$0xff]
    %v78 = vld [vmem:[#allocation6 + $0x60] sm:$0xff]
    %v79 = vld [vmem:[#allocation6 + $0x68] sm:$0xff]
    %v80 = vld [vmem:[#allocation6 + $0x70] sm:$0xff]
    %v81 = vld [vmem:[#allocation6 + $0x78] sm:$0xff]
    %v82 = vld [vmem:[#allocation6 + $0x80] sm:$0xff]
    %v83 = vld [vmem:[#allocation6 + $0x88] sm:$0xff]
    %v84 = vld [vmem:[#allocation6 + $0x90] sm:$0xff]
    %v85 = vld [vmem:[#allocation6 + $0x98] sm:$0xff]
    %v86 = vld [vmem:[#allocation6 + $0xa0] sm:$0xff]
    %v87 = vld [vmem:[#allocation6 + $0xa8] sm:$0xff]
    %v88 = vld [vmem:[#allocation6 + $0xb0] sm:$0xff]
    %v89 = vld [vmem:[#allocation6 + $0xb8] sm:$0xff]
    %v90 = vld [vmem:[#allocation6 + $0xc0] sm:$0xff]
    %v91 = vld [vmem:[#allocation6 + $0xc8] sm:$0xff]
    %v92 = vld [vmem:[#allocation6 + $0xd0] sm:$0xff]
    %v93 = vld [vmem:[#allocation6 + $0xd8] sm:$0xff]
    %v94 = vld [vmem:[#allocation6 + $0xe0] sm:$0xff]
    %v95 = vld [vmem:[#allocation6 + $0xe8] sm:$0xff]
    %v96 = vld [vmem:[#allocation6 + $0xf0] sm:$0xff]
    %v97 = vld [vmem:[#allocation6 + $0xf8] sm:$0xff]
    %v98 = vld [vmem:[#allocation7] sm:$0xff]
    %v99 = vld [vmem:[#allocation7 + $0x8] sm:$0xff]
    %v100 = vld [vmem:[#allocation7 + $0x10] sm:$0xff]
    %v101 = vld [vmem:[#allocation7 + $0x18] sm:$0xff]
    %v102 = vld [vmem:[#allocation7 + $0x20] sm:$0xff]
    %v103 = vld [vmem:[#allocation7 + $0x28] sm:$0xff]
    %v104 = vld [vmem:[#allocation7 + $0x30] sm:$0xff]
    %v105 = vld [vmem:[#allocation7 + $0x38] sm:$0xff]
    %v106 = vld [vmem:[#allocation7 + $0x40] sm:$0xff]
    %v107 = vld [vmem:[#allocation7 + $0x48] sm:$0xff]
    %v108 = vld [vmem:[#allocation7 + $0x50] sm:$0xff]
    %v109 = vld [vmem:[#allocation7 + $0x58] sm:$0xff]
    %v110 = vld [vmem:[#allocation7 + $0x60] sm:$0xff]
    %v111 = vld [vmem:[#allocation7 + $0x68] sm:$0xff]
    %v112 = vld [vmem:[#allocation7 + $0x70] sm:$0xff]
    %v113 = vld [vmem:[#allocation7 + $0x78] sm:$0xff]
    %v114 = vld [vmem:[%s3] sm:$0x1]
    %v116 = vperm.slane %v114, 0
    %118 = vmatpush.msra.mxu0 %v113
    %119 = vmatpush.msra.mxu0 %v112
    %120 = vmatpush.msra.mxu0 %v111
    %121 = vmatpush.msra.mxu0 %v110
    %122 = vmatpush.msra.mxu0 %v109
    %123 = vmatpush.msra.mxu0 %v108
    %124 = vmatpush.msra.mxu0 %v107
    %125 = vmatpush.msra.mxu0 %v106
    %126 = vmatpush.msra.mxu0 %v105
    %127 = vmatpush.msra.mxu0 %v104
    %128 = vmatpush.msra.mxu0 %v103
    %129 = vmatpush.msra.mxu0 %v102
    %130 = vmatpush.msra.mxu0 %v101
    %131 = vmatpush.msra.mxu0 %v100
    %132 = vmatpush.msra.mxu0 %v99
    %133 = vmatpush.msra.mxu0 %v98
    %134 = vmatmul.f32.gmra.mxu0 %v66
    %v135 = vpop.f32.mrf.mxu0
    %v136 = vadd.f32 %v116, %v135
    %137 = vmatmul.f32.gmra.mxu0 %v67
    %v138 = vpop.f32.mrf.mxu0
    %v139 = vadd.f32 %v116, %v138
    %140 = vmatmul.f32.gmra.mxu0 %v68
    %v141 = vpop.f32.mrf.mxu0
    %v142 = vadd.f32 %v116, %v141
    %143 = vmatmul.f32.gmra.mxu0 %v69
    %v144 = vpop.f32.mrf.mxu0
    %v145 = vadd.f32 %v116, %v144
    %146 = vmatmul.f32.gmra.mxu0 %v70
    %v147 = vpop.f32.mrf.mxu0
    %v148 = vadd.f32 %v116, %v147
    %149 = vmatmul.f32.gmra.mxu0 %v71
    %v150 = vpop.f32.mrf.mxu0
    %v151 = vadd.f32 %v116, %v150
    %152 = vmatmul.f32.gmra.mxu0 %v72
    %v153 = vpop.f32.mrf.mxu0
    %v154 = vadd.f32 %v116, %v153
    %155 = vmatmul.f32.gmra.mxu0 %v73
    %v156 = vpop.f32.mrf.mxu0
    %v157 = vadd.f32 %v116, %v156
    %158 = vmatmul.f32.gmra.mxu0 %v74
    %v159 = vpop.f32.mrf.mxu0
    %v160 = vadd.f32 %v116, %v159
    %161 = vmatmul.f32.gmra.mxu0 %v75
    %v162 = vpop.f32.mrf.mxu0
    %v163 = vadd.f32 %v116, %v162
    %164 = vmatmul.f32.gmra.mxu0 %v76
    %v165 = vpop.f32.mrf.mxu0
    %v166 = vadd.f32 %v116, %v165
    %167 = vmatmul.f32.gmra.mxu0 %v77
    %v168 = vpop.f32.mrf.mxu0
    %v169 = vadd.f32 %v116, %v168
    %170 = vmatmul.f32.gmra.mxu0 %v78
    %v171 = vpop.f32.mrf.mxu0
    %v172 = vadd.f32 %v116, %v171
    %173 = vmatmul.f32.gmra.mxu0 %v79
    %v174 = vpop.f32.mrf.mxu0
    %v175 = vadd.f32 %v116, %v174
    %176 = vmatmul.f32.gmra.mxu0 %v80
    %v177 = vpop.f32.mrf.mxu0
    %v178 = vadd.f32 %v116, %v177
    %179 = vmatmul.f32.gmra.mxu0 %v81
    %v180 = vpop.f32.mrf.mxu0
    %v181 = vadd.f32 %v116, %v180
    %182 = vmatmul.f32.gmra.mxu0 %v82
    %v183 = vpop.f32.mrf.mxu0
    %v184 = vadd.f32 %v116, %v183
    %185 = vmatmul.f32.gmra.mxu0 %v83
    %v186 = vpop.f32.mrf.mxu0
    %v187 = vadd.f32 %v116, %v186
    %188 = vmatmul.f32.gmra.mxu0 %v84
    %v189 = vpop.f32.mrf.mxu0
    %v190 = vadd.f32 %v116, %v189
    %191 = vmatmul.f32.gmra.mxu0 %v85
    %v192 = vpop.f32.mrf.mxu0
    %v193 = vadd.f32 %v116, %v192
    %194 = vmatmul.f32.gmra.mxu0 %v86
    %v195 = vpop.f32.mrf.mxu0
    %v196 = vadd.f32 %v116, %v195
    %197 = vmatmul.f32.gmra.mxu0 %v87
    %v198 = vpop.f32.mrf.mxu0
    %v199 = vadd.f32 %v116, %v198
    %200 = vmatmul.f32.gmra.mxu0 %v88
    %v201 = vpop.f32.mrf.mxu0
    %v202 = vadd.f32 %v116, %v201
    %203 = vmatmul.f32.gmra.mxu0 %v89
    %v204 = vpop.f32.mrf.mxu0
    %v205 = vadd.f32 %v116, %v204
    %206 = vmatmul.f32.gmra.mxu0 %v90
    %v207 = vpop.f32.mrf.mxu0
    %v208 = vadd.f32 %v116, %v207
    %209 = vmatmul.f32.gmra.mxu0 %v91
    %v210 = vpop.f32.mrf.mxu0
    %v211 = vadd.f32 %v116, %v210
    %212 = vmatmul.f32.gmra.mxu0 %v92
    %v213 = vpop.f32.mrf.mxu0
    %v214 = vadd.f32 %v116, %v213
    %215 = vmatmul.f32.gmra.mxu0 %v93
    %v216 = vpop.f32.mrf.mxu0
    %v217 = vadd.f32 %v116, %v216
    %218 = vmatmul.f32.gmra.mxu0 %v94
    %v219 = vpop.f32.mrf.mxu0
    %v220 = vadd.f32 %v116, %v219
    %221 = vmatmul.f32.gmra.mxu0 %v95
    %v222 = vpop.f32.mrf.mxu0
    %v223 = vadd.f32 %v116, %v222
    %224 = vmatmul.f32.gmra.mxu0 %v96
    %v225 = vpop.f32.mrf.mxu0
    %v226 = vadd.f32 %v116, %v225
    %227 = vmatmul.f32.gmra.mxu0 %v97
    %v228 = vpop.f32.mrf.mxu0
    %v229 = vadd.f32 %v116, %v228
    %230 = vdwg.mxu0
    %231 = vst [vmem:[#allocation10] sm:$0xff] %v136
    %232 = vst [vmem:[#allocation10 + $0x8] sm:$0xff] %v139
    %233 = vst [vmem:[#allocation10 + $0x10] sm:$0xff] %v142
    %234 = vst [vmem:[#allocation10 + $0x18] sm:$0xff] %v145
    %235 = vst [vmem:[#allocation10 + $0x20] sm:$0xff] %v148
    %236 = vst [vmem:[#allocation10 + $0x28] sm:$0xff] %v151
    %237 = vst [vmem:[#allocation10 + $0x30] sm:$0xff] %v154
    %238 = vst [vmem:[#allocation10 + $0x38] sm:$0xff] %v157
    %239 = vst [vmem:[#allocation10 + $0x40] sm:$0xff] %v160
    %240 = vst [vmem:[#allocation10 + $0x48] sm:$0xff] %v163
    %241 = vst [vmem:[#allocation10 + $0x50] sm:$0xff] %v166
    %242 = vst [vmem:[#allocation10 + $0x58] sm:$0xff] %v169
    %243 = vst [vmem:[#allocation10 + $0x60] sm:$0xff] %v172
    %244 = vst [vmem:[#allocation10 + $0x68] sm:$0xff] %v175
    %245 = vst [vmem:[#allocation10 + $0x70] sm:$0xff] %v178
    %246 = vst [vmem:[#allocation10 + $0x78] sm:$0xff] %v181
    %247 = vst [vmem:[#allocation10 + $0x80] sm:$0xff] %v184
    %248 = vst [vmem:[#allocation10 + $0x88] sm:$0xff] %v187
    %249 = vst [vmem:[#allocation10 + $0x90] sm:$0xff] %v190
    %250 = vst [vmem:[#allocation10 + $0x98] sm:$0xff] %v193
    %251 = vst [vmem:[#allocation10 + $0xa0] sm:$0xff] %v196
    %252 = vst [vmem:[#allocation10 + $0xa8] sm:$0xff] %v199
    %253 = vst [vmem:[#allocation10 + $0xb0] sm:$0xff] %v202
    %254 = vst [vmem:[#allocation10 + $0xb8] sm:$0xff] %v205
    %255 = vst [vmem:[#allocation10 + $0xc0] sm:$0xff] %v208
    %256 = vst [vmem:[#allocation10 + $0xc8] sm:$0xff] %v211
    %257 = vst [vmem:[#allocation10 + $0xd0] sm:$0xff] %v214
    %258 = vst [vmem:[#allocation10 + $0xd8] sm:$0xff] %v217
    %259 = vst [vmem:[#allocation10 + $0xe0] sm:$0xff] %v220
    %260 = vst [vmem:[#allocation10 + $0xe8] sm:$0xff] %v223
    %261 = vst [vmem:[#allocation10 + $0xf0] sm:$0xff] %v226
    %262 = vst [vmem:[#allocation10 + $0xf8] sm:$0xff] %v229
    %s263 = sld [smem:[#allocation2 + $0x5]]
    %s264 = sld [smem:[#allocation2 + $0x1]]
    %s265 = smul.f32 %s264, %s263
    %s266 = sadd.f32 %s265, 0.5
    %s267 = sfloor.f32 %s266
    %s268 = scvt.f32.s32.to.zero.pseudo %s267
    %s269 = sld [smem:[#allocation2 + $0x2]]
    %s270 = smul.f32 %s269, %s263
    %s271 = sadd.f32 %s270, 0.5
    %s272 = sfloor.f32 %s271
    %s273 = scvt.f32.s32.to.zero.pseudo %s272
    %s274 = sld [smem:[#allocation2 + $0x3]]
    %s275 = smul.f32 %s274, %s263
    %s276 = sadd.f32 %s275, 0.5
    %s277 = sfloor.f32 %s276
    %s278 = scvt.f32.s32.to.zero.pseudo %s277
    %s279 = sld [smem:[#allocation2 + $0x4]]
    %s280 = smul.f32 %s279, %s263
    %s281 = sadd.f32 %s280, 0.5
    %s282 = sfloor.f32 %s281
    %s283 = scvt.f32.s32.to.zero.pseudo %s282
    %s284 = ssub.s32 %s278, %s268
    %s285 = sadd.s32 %s284, 1
    %p286 = scmp.gt.s32.totalorder %s285, 1
    %s287 = scalar_select %p286, %s285, 1
    %s288 = ssub.s32 %s283, %s273
    %s289 = sadd.s32 %s288, 1
    %p290 = scmp.gt.s32.totalorder %s289, 1
    %s291 = scalar_select %p290, %s289, 1
    %s292 = scvt.s32.f32 %s291
    %v293 = vrcp.pop 7.0
    %v294 = vmul.f32 7.0, %v293
    %v295 = vsub.f32 1.0, %v294
    %v296 = vmul.f32 %v293, %v295
    %v297 = vadd.f32 %v293, %v296
    %vm298 = vweird.f32 %v293
    %v299 = vsel %vm298, %v293, %v297
    %s300 = vtos %v299
    %s301 = smul.f32 %s292, %s300
    %s302 = scvt.s32.f32 %s287
    %v303 = vrcp.pop 7.0
    %v304 = vmul.f32 7.0, %v303
    %v305 = vsub.f32 1.0, %v304
    %v306 = vmul.f32 %v303, %v305
    %v307 = vadd.f32 %v303, %v306
    %vm308 = vweird.f32 %v303
    %v309 = vsel %vm308, %v303, %v307
    %s310 = vtos %v309
    %s311 = smul.f32 %s302, %s310
    %v312 = vlaneseq
    %v313 = vshrl.u32 %v312, 7
    %v314 = vadd.s32 %v313, 8
    %s315 = smul.f32 %s311, 0.0
    %s316 = sfloor.f32 %s315
    %s317 = scvt.f32.s32.to.zero.pseudo %s316
    %s318 = sadd.s32 %s317, %s268
    %p319 = scmp.gt.s32.totalorder %s318, 0
    %s320 = scalar_select %p319, %s318, 0
    %p321 = scmp.lt.s32.totalorder %s320, 16
    %s322 = scalar_select %p321, %s320, 16
    %s323 = sceil.f32 %s311
    %s324 = scvt.f32.s32.to.zero.pseudo %s323
    %s325 = sadd.s32 %s324, %s268
    %p326 = scmp.gt.s32.totalorder %s325, 0
    %s327 = scalar_select %p326, %s325, 0
    %p328 = scmp.lt.s32.totalorder %s327, 16
    %s329 = scalar_select %p328, %s327, 16
    %v330 = vstv %s322
    %vm331 = vcmp.ge.s32.totalorder %v313, %v330
    %vm332 = vcmp.ge.s32.totalorder %v314, %v330
    %v333 = vstv %s329
    %vm334 = vcmp.lt.s32.totalorder %v313, %v333
    %vm335 = vcmp.lt.s32.totalorder %v314, %v333
    %vm336 = vmand %vm331, %vm334
    %vm337 = vmand %vm332, %vm335
    %v338 = vsel %vm336, 1, 0
    %v339 = vsel %vm337, 1, 0
    %vm340 = vcmp.eq.s32.totalorder %v338, 1
    %vm341 = vcmp.eq.s32.totalorder %v339, 1
    %v342 = vsel %vm340, %v136, -inf
    %v343 = vsel %vm341, %v139, -inf
    %v344 = vsel %vm340, %v142, -inf
    %v345 = vsel %vm341, %v145, -inf
    %v346 = vsel %vm340, %v148, -inf
    %v347 = vsel %vm341, %v151, -inf
    %v348 = vsel %vm340, %v154, -inf
    %v349 = vsel %vm341, %v157, -inf
    %v350 = vsel %vm340, %v160, -inf
    %v351 = vsel %vm341, %v163, -inf
    %v352 = vsel %vm340, %v166, -inf
    %v353 = vsel %vm341, %v169, -inf
    %v354 = vsel %vm340, %v172, -inf
    %v355 = vsel %vm341, %v175, -inf
    %v356 = vsel %vm340, %v178, -inf
    %v357 = vsel %vm341, %v181, -inf
    %v358 = vsel %vm340, %v184, -inf
    %v359 = vsel %vm341, %v187, -inf
    %v360 = vsel %vm340, %v190, -inf
    %v361 = vsel %vm341, %v193, -inf
    %v362 = vsel %vm340, %v196, -inf
    %v363 = vsel %vm341, %v199, -inf
    %v364 = vsel %vm340, %v202, -inf
    %v365 = vsel %vm341, %v205, -inf
    %v366 = vsel %vm340, %v208, -inf
    %v367 = vsel %vm341, %v211, -inf
    %v368 = vsel %vm340, %v214, -inf
    %v369 = vsel %vm341, %v217, -inf
    %v370 = vsel %vm340, %v220, -inf
    %v371 = vsel %vm341, %v223, -inf
    %v372 = vsel %vm340, %v226, -inf
    %v373 = vsel %vm341, %v229, -inf
    %v374 = vmax.f32 %v342, %v343
    %v375 = vrot.slane %v374, 4
    %v376 = vmax.f32 %v374, %v375
    %v377 = vrot.slane %v376, 2
    %v378 = vmax.f32 %v376, %v377
    %v379 = vrot.slane %v378, 1
    %v380 = vmax.f32 %v378, %v379
    %v381 = vmax.f32 %v344, %v345
    %v382 = vrot.slane %v381, 4
    %v383 = vmax.f32 %v381, %v382
    %v384 = vrot.slane %v383, 2
    %v385 = vmax.f32 %v383, %v384
    %v386 = vrot.slane %v385, 1
    %v387 = vmax.f32 %v385, %v386
    %v388 = vmax.f32 %v346, %v347
    %v389 = vrot.slane %v388, 4
    %v390 = vmax.f32 %v388, %v389
    %v391 = vrot.slane %v390, 2
    %v392 = vmax.f32 %v390, %v391
    %v393 = vrot.slane %v392, 1
    %v394 = vmax.f32 %v392, %v393
    %v395 = vmax.f32 %v348, %v349
    %v396 = vrot.slane %v395, 4
    %v397 = vmax.f32 %v395, %v396
    %v398 = vrot.slane %v397, 2
    %v399 = vmax.f32 %v397, %v398
    %v400 = vrot.slane %v399, 1
    %v401 = vmax.f32 %v399, %v400
    %v402 = vmax.f32 %v350, %v351
    %v403 = vrot.slane %v402, 4
    %v404 = vmax.f32 %v402, %v403
    %v405 = vrot.slane %v404, 2
    %v406 = vmax.f32 %v404, %v405
    %v407 = vrot.slane %v406, 1
    %v408 = vmax.f32 %v406, %v407
    %v409 = vmax.f32 %v352, %v353
    %v410 = vrot.slane %v409, 4
    %v411 = vmax.f32 %v409, %v410
    %v412 = vrot.slane %v411, 2
    %v413 = vmax.f32 %v411, %v412
    %v414 = vrot.slane %v413, 1
    %v415 = vmax.f32 %v413, %v414
    %v416 = vmax.f32 %v354, %v355
    %v417 = vrot.slane %v416, 4
    %v418 = vmax.f32 %v416, %v417
    %v419 = vrot.slane %v418, 2
    %v420 = vmax.f32 %v418, %v419
    %v421 = vrot.slane %v420, 1
    %v422 = vmax.f32 %v420, %v421
    %v423 = vmax.f32 %v356, %v357
    %v424 = vrot.slane %v423, 4
    %v425 = vmax.f32 %v423, %v424
    %v426 = vrot.slane %v425, 2
    %v427 = vmax.f32 %v425, %v426
    %v428 = vrot.slane %v427, 1
    %v429 = vmax.f32 %v427, %v428
    %v430 = vmax.f32 %v358, %v359
    %v431 = vrot.slane %v430, 4
    %v432 = vmax.f32 %v430, %v431
    %v433 = vrot.slane %v432, 2
    %v434 = vmax.f32 %v432, %v433
    %v435 = vrot.slane %v434, 1
    %v436 = vmax.f32 %v434, %v435
    %v437 = vmax.f32 %v360, %v361
    %v438 = vrot.slane %v437, 4
    %v439 = vmax.f32 %v437, %v438
    %v440 = vrot.slane %v439, 2
    %v441 = vmax.f32 %v439, %v440
    %v442 = vrot.slane %v441, 1
    %v443 = vmax.f32 %v441, %v442
    %v444 = vmax.f32 %v362, %v363
    %v445 = vrot.slane %v444, 4
    %v446 = vmax.f32 %v444, %v445
    %v447 = vrot.slane %v446, 2
    %v448 = vmax.f32 %v446, %v447
    %v449 = vrot.slane %v448, 1
    %v450 = vmax.f32 %v448, %v449
    %v451 = vmax.f32 %v364, %v365
    %v452 = vrot.slane %v451, 4
    %v453 = vmax.f32 %v451, %v452
    %v454 = vrot.slane %v453, 2
    %v455 = vmax.f32 %v453, %v454
    %v456 = vrot.slane %v455, 1
    %v457 = vmax.f32 %v455, %v456
    %v458 = vmax.f32 %v366, %v367
    %v459 = vrot.slane %v458, 4
    %v460 = vmax.f32 %v458, %v459
    %v461 = vrot.slane %v460, 2
    %v462 = vmax.f32 %v460, %v461
    %v463 = vrot.slane %v462, 1
    %v464 = vmax.f32 %v462, %v463
    %v465 = vmax.f32 %v368, %v369
    %v466 = vrot.slane %v465, 4
    %v467 = vmax.f32 %v465, %v466
    %v468 = vrot.slane %v467, 2
    %v469 = vmax.f32 %v467, %v468
    %v470 = vrot.slane %v469, 1
    %v471 = vmax.f32 %v469, %v470
    %v472 = vmax.f32 %v370, %v371
    %v473 = vrot.slane %v472, 4
    %v474 = vmax.f32 %v472, %v473
    %v475 = vrot.slane %v474, 2
    %v476 = vmax.f32 %v474, %v475
    %v477 = vrot.slane %v476, 1
    %v478 = vmax.f32 %v476, %v477
    %v479 = vmax.f32 %v372, %v373
    %v480 = vrot.slane %v479, 4
    %v481 = vmax.f32 %v479, %v480
    %v482 = vrot.slane %v481, 2
    %v483 = vmax.f32 %v481, %v482
    %v484 = vrot.slane %v483, 1
    %v485 = vmax.f32 %v483, %v484
    %p486 = scmp.le.s32.totalorder %s329, %s322
    %s487 = scalar_select %p486, 1, 0
    %v488 = vstv %s487
    %vm489 = vcmp.eq.s32.totalorder %v488, 1
    %v490 = vsel %vm489, 0.0, %v380
    %v491 = vsel %vm489, 0.0, %v387
    %v492 = vsel %vm489, 0.0, %v394
    %v493 = vsel %vm489, 0.0, %v401
    %v494 = vsel %vm489, 0.0, %v408
    %v495 = vsel %vm489, 0.0, %v415
    %v496 = vsel %vm489, 0.0, %v422
    %v497 = vsel %vm489, 0.0, %v429
    %v498 = vsel %vm489, 0.0, %v436
    %v499 = vsel %vm489, 0.0, %v443
    %v500 = vsel %vm489, 0.0, %v450
    %v501 = vsel %vm489, 0.0, %v457
    %v502 = vsel %vm489, 0.0, %v464
    %v503 = vsel %vm489, 0.0, %v471
    %v504 = vsel %vm489, 0.0, %v478
    %v505 = vsel %vm489, 0.0, %v485
    %s506 = sfloor.f32 %s311
    %s507 = scvt.f32.s32.to.zero.pseudo %s506
    %s508 = sadd.s32 %s507, %s268
    %p509 = scmp.gt.s32.totalorder %s508, 0
    %s510 = scalar_select %p509, %s508, 0
    %p511 = scmp.lt.s32.totalorder %s510, 16
    %s512 = scalar_select %p511, %s510, 16
    %s513 = smul.f32 %s311, 2.0
    %s514 = sceil.f32 %s513
    %s515 = scvt.f32.s32.to.zero.pseudo %s514
    %s516 = sadd.s32 %s515, %s268
    %p517 = scmp.gt.s32.totalorder %s516, 0
    %s518 = scalar_select %p517, %s516, 0
    %p519 = scmp.lt.s32.totalorder %s518, 16
    %s520 = scalar_select %p519, %s518, 16
    %v521 = vstv %s512
    %vm522 = vcmp.ge.s32.totalorder %v313, %v521
    %vm523 = vcmp.ge.s32.totalorder %v314, %v521
    %v524 = vstv %s520
    %vm525 = vcmp.lt.s32.totalorder %v313, %v524
    %vm526 = vcmp.lt.s32.totalorder %v314, %v524
    %vm527 = vmand %vm522, %vm525
    %vm528 = vmand %vm523, %vm526
    %v529 = vsel %vm527, 1, 0
    %v530 = vsel %vm528, 1, 0
    %vm531 = vcmp.eq.s32.totalorder %v529, 1
    %vm532 = vcmp.eq.s32.totalorder %v530, 1
    %v533 = vsel %vm531, %v136, -inf
    %v534 = vsel %vm532, %v139, -inf
    %v535 = vsel %vm531, %v142, -inf
    %v536 = vsel %vm532, %v145, -inf
    %v537 = vsel %vm531, %v148, -inf
    %v538 = vsel %vm532, %v151, -inf
    %v539 = vsel %vm531, %v154, -inf
    %v540 = vsel %vm532, %v157, -inf
    %v541 = vsel %vm531, %v160, -inf
    %v542 = vsel %vm532, %v163, -inf
    %v543 = vsel %vm531, %v166, -inf
    %v544 = vsel %vm532, %v169, -inf
    %v545 = vsel %vm531, %v172, -inf
    %v546 = vsel %vm532, %v175, -inf
    %v547 = vsel %vm531, %v178, -inf
    %v548 = vsel %vm532, %v181, -inf
    %v549 = vsel %vm531, %v184, -inf
    %v550 = vsel %vm532, %v187, -inf
    %v551 = vsel %vm531, %v190, -inf
    %v552 = vsel %vm532, %v193, -inf
    %v553 = vsel %vm531, %v196, -inf
    %v554 = vsel %vm532, %v199, -inf
    %v555 = vsel %vm531, %v202, -inf
    %v556 = vsel %vm532, %v205, -inf
    %v557 = vsel %vm531, %v208, -inf
    %v558 = vsel %vm532, %v211, -inf
    %v559 = vsel %vm531, %v214, -inf
    %v560 = vsel %vm532, %v217, -inf
    %v561 = vsel %vm531, %v220, -inf
    %v562 = vsel %vm532, %v223, -inf
    %v563 = vsel %vm531, %v226, -inf
    %v564 = vsel %vm532, %v229, -inf
    %v565 = vmax.f32 %v533, %v534
    %v566 = vrot.slane %v565, 4
    %v567 = vmax.f32 %v565, %v566
    %v568 = vrot.slane %v567, 2
    %v569 = vmax.f32 %v567, %v568
    %v570 = vrot.slane %v569, 1
    %v571 = vmax.f32 %v569, %v570
    %v572 = vmax.f32 %v535, %v536
    %v573 = vrot.slane %v572, 4
    %v574 = vmax.f32 %v572, %v573
    %v575 = vrot.slane %v574, 2
    %v576 = vmax.f32 %v574, %v575
    %v577 = vrot.slane %v576, 1
    %v578 = vmax.f32 %v576, %v577
    %v579 = vmax.f32 %v537, %v538
    %v580 = vrot.slane %v579, 4
    %v581 = vmax.f32 %v579, %v580
    %v582 = vrot.slane %v581, 2
    %v583 = vmax.f32 %v581, %v582
    %v584 = vrot.slane %v583, 1
    %v585 = vmax.f32 %v583, %v584
    %v586 = vmax.f32 %v539, %v540
    %v587 = vrot.slane %v586, 4
    %v588 = vmax.f32 %v586, %v587
    %v589 = vrot.slane %v588, 2
    %v590 = vmax.f32 %v588, %v589
    %v591 = vrot.slane %v590, 1
    %v592 = vmax.f32 %v590, %v591
    %v593 = vmax.f32 %v541, %v542
    %v594 = vrot.slane %v593, 4
    %v595 = vmax.f32 %v593, %v594
    %v596 = vrot.slane %v595, 2
    %v597 = vmax.f32 %v595, %v596
    %v598 = vrot.slane %v597, 1
    %v599 = vmax.f32 %v597, %v598
    %v600 = vmax.f32 %v543, %v544
    %v601 = vrot.slane %v600, 4
    %v602 = vmax.f32 %v600, %v601
    %v603 = vrot.slane %v602, 2
    %v604 = vmax.f32 %v602, %v603
    %v605 = vrot.slane %v604, 1
    %v606 = vmax.f32 %v604, %v605
    %v607 = vmax.f32 %v545, %v546
    %v608 = vrot.slane %v607, 4
    %v609 = vmax.f32 %v607, %v608
    %v610 = vrot.slane %v609, 2
    %v611 = vmax.f32 %v609, %v610
    %v612 = vrot.slane %v611, 1
    %v613 = vmax.f32 %v611, %v612
    %v614 = vmax.f32 %v547, %v548
    %v615 = vrot.slane %v614, 4
    %v616 = vmax.f32 %v614, %v615
    %v617 = vrot.slane %v616, 2
    %v618 = vmax.f32 %v616, %v617
    %v619 = vrot.slane %v618, 1
    %v620 = vmax.f32 %v618, %v619
    %v621 = vmax.f32 %v549, %v550
    %v622 = vrot.slane %v621, 4
    %v623 = vmax.f32 %v621, %v622
    %v624 = vrot.slane %v623, 2
    %v625 = vmax.f32 %v623, %v624
    %v626 = vrot.slane %v625, 1
    %v627 = vmax.f32 %v625, %v626
    %v628 = vmax.f32 %v551, %v552
    %v629 = vrot.slane %v628, 4
    %v630 = vmax.f32 %v628, %v629
    %v631 = vrot.slane %v630, 2
    %v632 = vmax.f32 %v630, %v631
    %v633 = vrot.slane %v632, 1
    %v634 = vmax.f32 %v632, %v633
    %v635 = vmax.f32 %v553, %v554
    %v636 = vrot.slane %v635, 4
    %v637 = vmax.f32 %v635, %v636
    %v638 = vrot.slane %v637, 2
    %v639 = vmax.f32 %v637, %v638
    %v640 = vrot.slane %v639, 1
    %v641 = vmax.f32 %v639, %v640
    %v642 = vmax.f32 %v555, %v556
    %v643 = vrot.slane %v642, 4
    %v644 = vmax.f32 %v642, %v643
    %v645 = vrot.slane %v644, 2
    %v646 = vmax.f32 %v644, %v645
    %v647 = vrot.slane %v646, 1
    %v648 = vmax.f32 %v646, %v647
    %v649 = vmax.f32 %v557, %v558
    %v650 = vrot.slane %v649, 4
    %v651 = vmax.f32 %v649, %v650
    %v652 = vrot.slane %v651, 2
    %v653 = vmax.f32 %v651, %v652
    %v654 = vrot.slane %v653, 1
    %v655 = vmax.f32 %v653, %v654
    %v656 = vmax.f32 %v559, %v560
    %v657 = vrot.slane %v656, 4
    %v658 = vmax.f32 %v656, %v657
    %v659 = vrot.slane %v658, 2
    %v660 = vmax.f32 %v658, %v659
    %v661 = vrot.slane %v660, 1
    %v662 = vmax.f32 %v660, %v661
    %v663 = vmax.f32 %v561, %v562
    %v664 = vrot.slane %v663, 4
    %v665 = vmax.f32 %v663, %v664
    %v666 = vrot.slane %v665, 2
    %v667 = vmax.f32 %v665, %v666
    %v668 = vrot.slane %v667, 1
    %v669 = vmax.f32 %v667, %v668
    %v670 = vmax.f32 %v563, %v564
    %v671 = vrot.slane %v670, 4
    %v672 = vmax.f32 %v670, %v671
    %v673 = vrot.slane %v672, 2
    %v674 = vmax.f32 %v672, %v673
    %v675 = vrot.slane %v674, 1
    %v676 = vmax.f32 %v674, %v675
    %p677 = scmp.le.s32.totalorder %s520, %s512
    %s678 = scalar_select %p677, 1, 0
    %v679 = vstv %s678
    %vm680 = vcmp.eq.s32.totalorder %v679, 1
    %v681 = vsel %vm680, 0.0, %v571
    %v682 = vsel %vm680, 0.0, %v578
    %v683 = vsel %vm680, 0.0, %v585
    %v684 = vsel %vm680, 0.0, %v592
    %v685 = vsel %vm680, 0.0, %v599
    %v686 = vsel %vm680, 0.0, %v606
    %v687 = vsel %vm680, 0.0, %v613
    %v688 = vsel %vm680, 0.0, %v620
    %v689 = vsel %vm680, 0.0, %v627
    %v690 = vsel %vm680, 0.0, %v634
    %v691 = vsel %vm680, 0.0, %v641
    %v692 = vsel %vm680, 0.0, %v648
    %v693 = vsel %vm680, 0.0, %v655
    %v694 = vsel %vm680, 0.0, %v662
    %v695 = vsel %vm680, 0.0, %v669
    %v696 = vsel %vm680, 0.0, %v676
    %s697 = sfloor.f32 %s513
    %s698 = scvt.f32.s32.to.zero.pseudo %s697
    %s699 = sadd.s32 %s698, %s268
    %p700 = scmp.gt.s32.totalorder %s699, 0
    %s701 = scalar_select %p700, %s699, 0
    %p702 = scmp.lt.s32.totalorder %s701, 16
    %s703 = scalar_select %p702, %s701, 16
    %s704 = smul.f32 %s311, 3.0
    %s705 = sceil.f32 %s704
    %s706 = scvt.f32.s32.to.zero.pseudo %s705
    %s707 = sadd.s32 %s706, %s268
    %p708 = scmp.gt.s32.totalorder %s707, 0
    %s709 = scalar_select %p708, %s707, 0
    %p710 = scmp.lt.s32.totalorder %s709, 16
    %s711 = scalar_select %p710, %s709, 16
    %v712 = vstv %s703
    %vm713 = vcmp.ge.s32.totalorder %v313, %v712
    %vm714 = vcmp.ge.s32.totalorder %v314, %v712
    %v715 = vstv %s711
    %vm716 = vcmp.lt.s32.totalorder %v313, %v715
    %vm717 = vcmp.lt.s32.totalorder %v314, %v715
    %vm718 = vmand %vm713, %vm716
    %vm719 = vmand %vm714, %vm717
    %v720 = vsel %vm718, 1, 0
    %v721 = vsel %vm719, 1, 0
    %vm722 = vcmp.eq.s32.totalorder %v720, 1
    %vm723 = vcmp.eq.s32.totalorder %v721, 1
    %v724 = vsel %vm722, %v136, -inf
    %v725 = vsel %vm723, %v139, -inf
    %v726 = vsel %vm722, %v142, -inf
    %v727 = vsel %vm723, %v145, -inf
    %v728 = vsel %vm722, %v148, -inf
    %v729 = vsel %vm723, %v151, -inf
    %v730 = vsel %vm722, %v154, -inf
    %v731 = vsel %vm723, %v157, -inf
    %v732 = vsel %vm722, %v160, -inf
    %v733 = vsel %vm723, %v163, -inf
    %v734 = vsel %vm722, %v166, -inf
    %v735 = vsel %vm723, %v169, -inf
    %v736 = vsel %vm722, %v172, -inf
    %v737 = vsel %vm723, %v175, -inf
    %v738 = vsel %vm722, %v178, -inf
    %v739 = vsel %vm723, %v181, -inf
    %v740 = vsel %vm722, %v184, -inf
    %v741 = vsel %vm723, %v187, -inf
    %v742 = vsel %vm722, %v190, -inf
    %v743 = vsel %vm723, %v193, -inf
    %v744 = vsel %vm722, %v196, -inf
    %v745 = vsel %vm723, %v199, -inf
    %v746 = vsel %vm722, %v202, -inf
    %v747 = vsel %vm723, %v205, -inf
    %v748 = vsel %vm722, %v208, -inf
    %v749 = vsel %vm723, %v211, -inf
    %v750 = vsel %vm722, %v214, -inf
    %v751 = vsel %vm723, %v217, -inf
    %v752 = vsel %vm722, %v220, -inf
    %v753 = vsel %vm723, %v223, -inf
    %v754 = vsel %vm722, %v226, -inf
    %v755 = vsel %vm723, %v229, -inf
    %v756 = vmax.f32 %v724, %v725
    %v757 = vrot.slane %v756, 4
    %v758 = vmax.f32 %v756, %v757
    %v759 = vrot.slane %v758, 2
    %v760 = vmax.f32 %v758, %v759
    %v761 = vrot.slane %v760, 1
    %v762 = vmax.f32 %v760, %v761
    %v763 = vmax.f32 %v726, %v727
    %v764 = vrot.slane %v763, 4
    %v765 = vmax.f32 %v763, %v764
    %v766 = vrot.slane %v765, 2
    %v767 = vmax.f32 %v765, %v766
    %v768 = vrot.slane %v767, 1
    %v769 = vmax.f32 %v767, %v768
    %v770 = vmax.f32 %v728, %v729
    %v771 = vrot.slane %v770, 4
    %v772 = vmax.f32 %v770, %v771
    %v773 = vrot.slane %v772, 2
    %v774 = vmax.f32 %v772, %v773
    %v775 = vrot.slane %v774, 1
    %v776 = vmax.f32 %v774, %v775
    %v777 = vmax.f32 %v730, %v731
    %v778 = vrot.slane %v777, 4
    %v779 = vmax.f32 %v777, %v778
    %v780 = vrot.slane %v779, 2
    %v781 = vmax.f32 %v779, %v780
    %v782 = vrot.slane %v781, 1
    %v783 = vmax.f32 %v781, %v782
    %v784 = vmax.f32 %v732, %v733
    %v785 = vrot.slane %v784, 4
    %v786 = vmax.f32 %v784, %v785
    %v787 = vrot.slane %v786, 2
    %v788 = vmax.f32 %v786, %v787
    %v789 = vrot.slane %v788, 1
    %v790 = vmax.f32 %v788, %v789
    %v791 = vmax.f32 %v734, %v735
    %v792 = vrot.slane %v791, 4
    %v793 = vmax.f32 %v791, %v792
    %v794 = vrot.slane %v793, 2
    %v795 = vmax.f32 %v793, %v794
    %v796 = vrot.slane %v795, 1
    %v797 = vmax.f32 %v795, %v796
    %v798 = vmax.f32 %v736, %v737
    %v799 = vrot.slane %v798, 4
    %v800 = vmax.f32 %v798, %v799
    %v801 = vrot.slane %v800, 2
    %v802 = vmax.f32 %v800, %v801
    %v803 = vrot.slane %v802, 1
    %v804 = vmax.f32 %v802, %v803
    %v805 = vmax.f32 %v738, %v739
    %v806 = vrot.slane %v805, 4
    %v807 = vmax.f32 %v805, %v806
    %v808 = vrot.slane %v807, 2
    %v809 = vmax.f32 %v807, %v808
    %v810 = vrot.slane %v809, 1
    %v811 = vmax.f32 %v809, %v810
    %v812 = vmax.f32 %v740, %v741
    %v813 = vrot.slane %v812, 4
    %v814 = vmax.f32 %v812, %v813
    %v815 = vrot.slane %v814, 2
    %v816 = vmax.f32 %v814, %v815
    %v817 = vrot.slane %v816, 1
    %v818 = vmax.f32 %v816, %v817
    %v819 = vmax.f32 %v742, %v743
    %v820 = vrot.slane %v819, 4
    %v821 = vmax.f32 %v819, %v820
    %v822 = vrot.slane %v821, 2
    %v823 = vmax.f32 %v821, %v822
    %v824 = vrot.slane %v823, 1
    %v825 = vmax.f32 %v823, %v824
    %v826 = vmax.f32 %v744, %v745
    %v827 = vrot.slane %v826, 4
    %v828 = vmax.f32 %v826, %v827
    %v829 = vrot.slane %v828, 2
    %v830 = vmax.f32 %v828, %v829
    %v831 = vrot.slane %v830, 1
    %v832 = vmax.f32 %v830, %v831
    %v833 = vmax.f32 %v746, %v747
    %v834 = vrot.slane %v833, 4
    %v835 = vmax.f32 %v833, %v834
    %v836 = vrot.slane %v835, 2
    %v837 = vmax.f32 %v835, %v836
    %v838 = vrot.slane %v837, 1
    %v839 = vmax.f32 %v837, %v838
    %v840 = vmax.f32 %v748, %v749
    %v841 = vrot.slane %v840, 4
    %v842 = vmax.f32 %v840, %v841
    %v843 = vrot.slane %v842, 2
    %v844 = vmax.f32 %v842, %v843
    %v845 = vrot.slane %v844, 1
    %v846 = vmax.f32 %v844, %v845
    %v847 = vmax.f32 %v750, %v751
    %v848 = vrot.slane %v847, 4
    %v849 = vmax.f32 %v847, %v848
    %v850 = vrot.slane %v849, 2
    %v851 = vmax.f32 %v849, %v850
    %v852 = vrot.slane %v851, 1
    %v853 = vmax.f32 %v851, %v852
    %v854 = vmax.f32 %v752, %v753
    %v855 = vrot.slane %v854, 4
    %v856 = vmax.f32 %v854, %v855
    %v857 = vrot.slane %v856, 2
    %v858 = vmax.f32 %v856, %v857
    %v859 = vrot.slane %v858, 1
    %v860 = vmax.f32 %v858, %v859
    %v861 = vmax.f32 %v754, %v755
    %v862 = vrot.slane %v861, 4
    %v863 = vmax.f32 %v861, %v862
    %v864 = vrot.slane %v863, 2
    %v865 = vmax.f32 %v863, %v864
    %v866 = vrot.slane %v865, 1
    %v867 = vmax.f32 %v865, %v866
    %p868 = scmp.le.s32.totalorder %s711, %s703
    %s869 = scalar_select %p868, 1, 0
    %v870 = vstv %s869
    %vm871 = vcmp.eq.s32.totalorder %v870, 1
    %v872 = vsel %vm871, 0.0, %v762
    %v873 = vsel %vm871, 0.0, %v769
    %v874 = vsel %vm871, 0.0, %v776
    %v875 = vsel %vm871, 0.0, %v783
    %v876 = vsel %vm871, 0.0, %v790
    %v877 = vsel %vm871, 0.0, %v797
    %v878 = vsel %vm871, 0.0, %v804
    %v879 = vsel %vm871, 0.0, %v811
    %v880 = vsel %vm871, 0.0, %v818
    %v881 = vsel %vm871, 0.0, %v825
    %v882 = vsel %vm871, 0.0, %v832
    %v883 = vsel %vm871, 0.0, %v839
    %v884 = vsel %vm871, 0.0, %v846
    %v885 = vsel %vm871, 0.0, %v853
    %v886 = vsel %vm871, 0.0, %v860
    %v887 = vsel %vm871, 0.0, %v867
    %s888 = sfloor.f32 %s704
    %s889 = scvt.f32.s32.to.zero.pseudo %s888
    %s890 = sadd.s32 %s889, %s268
    %p891 = scmp.gt.s32.totalorder %s890, 0
    %s892 = scalar_select %p891, %s890, 0
    %p893 = scmp.lt.s32.totalorder %s892, 16
    %s894 = scalar_select %p893, %s892, 16
    %s895 = smul.f32 %s311, 4.0
    %s896 = sceil.f32 %s895
    %s897 = scvt.f32.s32.to.zero.pseudo %s896
    %s898 = sadd.s32 %s897, %s268
    %p899 = scmp.gt.s32.totalorder %s898, 0
    %s900 = scalar_select %p899, %s898, 0
    %p901 = scmp.lt.s32.totalorder %s900, 16
    %s902 = scalar_select %p901, %s900, 16
    %v903 = vstv %s894
    %vm904 = vcmp.ge.s32.totalorder %v313, %v903
    %vm905 = vcmp.ge.s32.totalorder %v314, %v903
    %v906 = vstv %s902
    %vm907 = vcmp.lt.s32.totalorder %v313, %v906
    %vm908 = vcmp.lt.s32.totalorder %v314, %v906
    %vm909 = vmand %vm904, %vm907
    %vm910 = vmand %vm905, %vm908
    %v911 = vsel %vm909, 1, 0
    %v912 = vsel %vm910, 1, 0
    %vm913 = vcmp.eq.s32.totalorder %v911, 1
    %vm914 = vcmp.eq.s32.totalorder %v912, 1
    %v915 = vsel %vm913, %v136, -inf
    %v916 = vsel %vm914, %v139, -inf
    %v917 = vsel %vm913, %v142, -inf
    %v918 = vsel %vm914, %v145, -inf
    %v919 = vsel %vm913, %v148, -inf
    %v920 = vsel %vm914, %v151, -inf
    %v921 = vsel %vm913, %v154, -inf
    %v922 = vsel %vm914, %v157, -inf
    %v923 = vsel %vm913, %v160, -inf
    %v924 = vsel %vm914, %v163, -inf
    %v925 = vsel %vm913, %v166, -inf
    %v926 = vsel %vm914, %v169, -inf
    %v927 = vsel %vm913, %v172, -inf
    %v928 = vsel %vm914, %v175, -inf
    %v929 = vsel %vm913, %v178, -inf
    %v930 = vsel %vm914, %v181, -inf
    %v931 = vsel %vm913, %v184, -inf
    %v932 = vsel %vm914, %v187, -inf
    %v933 = vsel %vm913, %v190, -inf
    %v934 = vsel %vm914, %v193, -inf
    %v935 = vsel %vm913, %v196, -inf
    %v936 = vsel %vm914, %v199, -inf
    %v937 = vsel %vm913, %v202, -inf
    %v938 = vsel %vm914, %v205, -inf
    %v939 = vsel %vm913, %v208, -inf
    %v940 = vsel %vm914, %v211, -inf
    %v941 = vsel %vm913, %v214, -inf
    %v942 = vsel %vm914, %v217, -inf
    %v943 = vsel %vm913, %v220, -inf
    %v944 = vsel %vm914, %v223, -inf
    %v945 = vsel %vm913, %v226, -inf
    %v946 = vsel %vm914, %v229, -inf
    %v947 = vmax.f32 %v915, %v916
    %v948 = vrot.slane %v947, 4
    %v949 = vmax.f32 %v947, %v948
    %v950 = vrot.slane %v949, 2
    %v951 = vmax.f32 %v949, %v950
    %v952 = vrot.slane %v951, 1
    %v953 = vmax.f32 %v951, %v952
    %v954 = vmax.f32 %v917, %v918
    %v955 = vrot.slane %v954, 4
    %v956 = vmax.f32 %v954, %v955
    %v957 = vrot.slane %v956, 2
    %v958 = vmax.f32 %v956, %v957
    %v959 = vrot.slane %v958, 1
    %v960 = vmax.f32 %v958, %v959
    %v961 = vmax.f32 %v919, %v920
    %v962 = vrot.slane %v961, 4
    %v963 = vmax.f32 %v961, %v962
    %v964 = vrot.slane %v963, 2
    %v965 = vmax.f32 %v963, %v964
    %v966 = vrot.slane %v965, 1
    %v967 = vmax.f32 %v965, %v966
    %v968 = vmax.f32 %v921, %v922
    %v969 = vrot.slane %v968, 4
    %v970 = vmax.f32 %v968, %v969
    %v971 = vrot.slane %v970, 2
    %v972 = vmax.f32 %v970, %v971
    %v973 = vrot.slane %v972, 1
    %v974 = vmax.f32 %v972, %v973
    %v975 = vmax.f32 %v923, %v924
    %v976 = vrot.slane %v975, 4
    %v977 = vmax.f32 %v975, %v976
    %v978 = vrot.slane %v977, 2
    %v979 = vmax.f32 %v977, %v978
    %v980 = vrot.slane %v979, 1
    %v981 = vmax.f32 %v979, %v980
    %v982 = vmax.f32 %v925, %v926
    %v983 = vrot.slane %v982, 4
    %v984 = vmax.f32 %v982, %v983
    %v985 = vrot.slane %v984, 2
    %v986 = vmax.f32 %v984, %v985
    %v987 = vrot.slane %v986, 1
    %v988 = vmax.f32 %v986, %v987
    %v989 = vmax.f32 %v927, %v928
    %v990 = vrot.slane %v989, 4
    %v991 = vmax.f32 %v989, %v990
    %v992 = vrot.slane %v991, 2
    %v993 = vmax.f32 %v991, %v992
    %v994 = vrot.slane %v993, 1
    %v995 = vmax.f32 %v993, %v994
    %v996 = vmax.f32 %v929, %v930
    %v997 = vrot.slane %v996, 4
    %v998 = vmax.f32 %v996, %v997
    %v999 = vrot.slane %v998, 2
    %v1000 = vmax.f32 %v998, %v999
    %v1001 = vrot.slane %v1000, 1
    %v1002 = vmax.f32 %v1000, %v1001
    %v1003 = vmax.f32 %v931, %v932
    %v1004 = vrot.slane %v1003, 4
    %v1005 = vmax.f32 %v1003, %v1004
    %v1006 = vrot.slane %v1005, 2
    %v1007 = vmax.f32 %v1005, %v1006
    %v1008 = vrot.slane %v1007, 1
    %v1009 = vmax.f32 %v1007, %v1008
    %v1010 = vmax.f32 %v933, %v934
    %v1011 = vrot.slane %v1010, 4
    %v1012 = vmax.f32 %v1010, %v1011
    %v1013 = vrot.slane %v1012, 2
    %v1014 = vmax.f32 %v1012, %v1013
    %v1015 = vrot.slane %v1014, 1
    %v1016 = vmax.f32 %v1014, %v1015
    %v1017 = vmax.f32 %v935, %v936
    %v1018 = vrot.slane %v1017, 4
    %v1019 = vmax.f32 %v1017, %v1018
    %v1020 = vrot.slane %v1019, 2
    %v1021 = vmax.f32 %v1019, %v1020
    %v1022 = vrot.slane %v1021, 1
    %v1023 = vmax.f32 %v1021, %v1022
    %v1024 = vmax.f32 %v937, %v938
    %v1025 = vrot.slane %v1024, 4
    %v1026 = vmax.f32 %v1024, %v1025
    %v1027 = vrot.slane %v1026, 2
    %v1028 = vmax.f32 %v1026, %v1027
    %v1029 = vrot.slane %v1028, 1
    %v1030 = vmax.f32 %v1028, %v1029
    %v1031 = vmax.f32 %v939, %v940
    %v1032 = vrot.slane %v1031, 4
    %v1033 = vmax.f32 %v1031, %v1032
    %v1034 = vrot.slane %v1033, 2
    %v1035 = vmax.f32 %v1033, %v1034
    %v1036 = vrot.slane %v1035, 1
    %v1037 = vmax.f32 %v1035, %v1036
    %v1038 = vmax.f32 %v941, %v942
    %v1039 = vrot.slane %v1038, 4
    %v1040 = vmax.f32 %v1038, %v1039
    %v1041 = vrot.slane %v1040, 2
    %v1042 = vmax.f32 %v1040, %v1041
    %v1043 = vrot.slane %v1042, 1
    %v1044 = vmax.f32 %v1042, %v1043
    %v1045 = vmax.f32 %v943, %v944
    %v1046 = vrot.slane %v1045, 4
    %v1047 = vmax.f32 %v1045, %v1046
    %v1048 = vrot.slane %v1047, 2
    %v1049 = vmax.f32 %v1047, %v1048
    %v1050 = vrot.slane %v1049, 1
    %v1051 = vmax.f32 %v1049, %v1050
    %v1052 = vmax.f32 %v945, %v946
    %v1053 = vrot.slane %v1052, 4
    %v1054 = vmax.f32 %v1052, %v1053
    %v1055 = vrot.slane %v1054, 2
    %v1056 = vmax.f32 %v1054, %v1055
    %v1057 = vrot.slane %v1056, 1
    %v1058 = vmax.f32 %v1056, %v1057
    %p1059 = scmp.le.s32.totalorder %s902, %s894
    %s1060 = scalar_select %p1059, 1, 0
    %v1061 = vstv %s1060
    %vm1062 = vcmp.eq.s32.totalorder %v1061, 1
    %v1063 = vsel %vm1062, 0.0, %v953
    %v1064 = vsel %vm1062, 0.0, %v960
    %v1065 = vsel %vm1062, 0.0, %v967
    %v1066 = vsel %vm1062, 0.0, %v974
    %v1067 = vsel %vm1062, 0.0, %v981
    %v1068 = vsel %vm1062, 0.0, %v988
    %v1069 = vsel %vm1062, 0.0, %v995
    %v1070 = vsel %vm1062, 0.0, %v1002
    %v1071 = vsel %vm1062, 0.0, %v1009
    %v1072 = vsel %vm1062, 0.0, %v1016
    %v1073 = vsel %vm1062, 0.0, %v1023
    %v1074 = vsel %vm1062, 0.0, %v1030
    %v1075 = vsel %vm1062, 0.0, %v1037
    %v1076 = vsel %vm1062, 0.0, %v1044
    %v1077 = vsel %vm1062, 0.0, %v1051
    %v1078 = vsel %vm1062, 0.0, %v1058
    %s1079 = sfloor.f32 %s895
    %s1080 = scvt.f32.s32.to.zero.pseudo %s1079
    %s1081 = sadd.s32 %s1080, %s268
    %p1082 = scmp.gt.s32.totalorder %s1081, 0
    %s1083 = scalar_select %p1082, %s1081, 0
    %p1084 = scmp.lt.s32.totalorder %s1083, 16
    %s1085 = scalar_select %p1084, %s1083, 16
    %s1086 = smul.f32 %s311, 5.0
    %s1087 = sceil.f32 %s1086
    %s1088 = scvt.f32.s32.to.zero.pseudo %s1087
    %s1089 = sadd.s32 %s1088, %s268
    %p1090 = scmp.gt.s32.totalorder %s1089, 0
    %s1091 = scalar_select %p1090, %s1089, 0
    %p1092 = scmp.lt.s32.totalorder %s1091, 16
    %s1093 = scalar_select %p1092, %s1091, 16
    %v1094 = vstv %s1085
    %vm1095 = vcmp.ge.s32.totalorder %v313, %v1094
    %vm1096 = vcmp.ge.s32.totalorder %v314, %v1094
    %v1097 = vstv %s1093
    %vm1098 = vcmp.lt.s32.totalorder %v313, %v1097
    %vm1099 = vcmp.lt.s32.totalorder %v314, %v1097
    %vm1100 = vmand %vm1095, %vm1098
    %vm1101 = vmand %vm1096, %vm1099
    %v1102 = vsel %vm1100, 1, 0
    %v1103 = vsel %vm1101, 1, 0
    %vm1104 = vcmp.eq.s32.totalorder %v1102, 1
    %vm1105 = vcmp.eq.s32.totalorder %v1103, 1
    %v1106 = vsel %vm1104, %v136, -inf
    %v1107 = vsel %vm1105, %v139, -inf
    %v1108 = vsel %vm1104, %v142, -inf
    %v1109 = vsel %vm1105, %v145, -inf
    %v1110 = vsel %vm1104, %v148, -inf
    %v1111 = vsel %vm1105, %v151, -inf
    %v1112 = vsel %vm1104, %v154, -inf
    %v1113 = vsel %vm1105, %v157, -inf
    %v1114 = vsel %vm1104, %v160, -inf
    %v1115 = vsel %vm1105, %v163, -inf
    %v1116 = vsel %vm1104, %v166, -inf
    %v1117 = vsel %vm1105, %v169, -inf
    %v1118 = vsel %vm1104, %v172, -inf
    %v1119 = vsel %vm1105, %v175, -inf
    %v1120 = vsel %vm1104, %v178, -inf
    %v1121 = vsel %vm1105, %v181, -inf
    %v1122 = vsel %vm1104, %v184, -inf
    %v1123 = vsel %vm1105, %v187, -inf
    %v1124 = vsel %vm1104, %v190, -inf
    %v1125 = vsel %vm1105, %v193, -inf
    %v1126 = vsel %vm1104, %v196, -inf
    %v1127 = vsel %vm1105, %v199, -inf
    %v1128 = vsel %vm1104, %v202, -inf
    %v1129 = vsel %vm1105, %v205, -inf
    %v1130 = vsel %vm1104, %v208, -inf
    %v1131 = vsel %vm1105, %v211, -inf
    %v1132 = vsel %vm1104, %v214, -inf
    %v1133 = vsel %vm1105, %v217, -inf
    %v1134 = vsel %vm1104, %v220, -inf
    %v1135 = vsel %vm1105, %v223, -inf
    %v1136 = vsel %vm1104, %v226, -inf
    %v1137 = vsel %vm1105, %v229, -inf
    %v1138 = vmax.f32 %v1106, %v1107
    %v1139 = vrot.slane %v1138, 4
    %v1140 = vmax.f32 %v1138, %v1139
    %v1141 = vrot.slane %v1140, 2
    %v1142 = vmax.f32 %v1140, %v1141
    %v1143 = vrot.slane %v1142, 1
    %v1144 = vmax.f32 %v1142, %v1143
    %v1145 = vmax.f32 %v1108, %v1109
    %v1146 = vrot.slane %v1145, 4
    %v1147 = vmax.f32 %v1145, %v1146
    %v1148 = vrot.slane %v1147, 2
    %v1149 = vmax.f32 %v1147, %v1148
    %v1150 = vrot.slane %v1149, 1
    %v1151 = vmax.f32 %v1149, %v1150
    %v1152 = vmax.f32 %v1110, %v1111
    %v1153 = vrot.slane %v1152, 4
    %v1154 = vmax.f32 %v1152, %v1153
    %v1155 = vrot.slane %v1154, 2
    %v1156 = vmax.f32 %v1154, %v1155
    %v1157 = vrot.slane %v1156, 1
    %v1158 = vmax.f32 %v1156, %v1157
    %v1159 = vmax.f32 %v1112, %v1113
    %v1160 = vrot.slane %v1159, 4
    %v1161 = vmax.f32 %v1159, %v1160
    %v1162 = vrot.slane %v1161, 2
    %v1163 = vmax.f32 %v1161, %v1162
    %v1164 = vrot.slane %v1163, 1
    %v1165 = vmax.f32 %v1163, %v1164
    %v1166 = vmax.f32 %v1114, %v1115
    %v1167 = vrot.slane %v1166, 4
    %v1168 = vmax.f32 %v1166, %v1167
    %v1169 = vrot.slane %v1168, 2
    %v1170 = vmax.f32 %v1168, %v1169
    %v1171 = vrot.slane %v1170, 1
    %v1172 = vmax.f32 %v1170, %v1171
    %v1173 = vmax.f32 %v1116, %v1117
    %v1174 = vrot.slane %v1173, 4
    %v1175 = vmax.f32 %v1173, %v1174
    %v1176 = vrot.slane %v1175, 2
    %v1177 = vmax.f32 %v1175, %v1176
    %v1178 = vrot.slane %v1177, 1
    %v1179 = vmax.f32 %v1177, %v1178
    %v1180 = vmax.f32 %v1118, %v1119
    %v1181 = vrot.slane %v1180, 4
    %v1182 = vmax.f32 %v1180, %v1181
    %v1183 = vrot.slane %v1182, 2
    %v1184 = vmax.f32 %v1182, %v1183
    %v1185 = vrot.slane %v1184, 1
    %v1186 = vmax.f32 %v1184, %v1185
    %v1187 = vmax.f32 %v1120, %v1121
    %v1188 = vrot.slane %v1187, 4
    %v1189 = vmax.f32 %v1187, %v1188
    %v1190 = vrot.slane %v1189, 2
    %v1191 = vmax.f32 %v1189, %v1190
    %v1192 = vrot.slane %v1191, 1
    %v1193 = vmax.f32 %v1191, %v1192
    %v1194 = vmax.f32 %v1122, %v1123
    %v1195 = vrot.slane %v1194, 4
    %v1196 = vmax.f32 %v1194, %v1195
    %v1197 = vrot.slane %v1196, 2
    %v1198 = vmax.f32 %v1196, %v1197
    %v1199 = vrot.slane %v1198, 1
    %v1200 = vmax.f32 %v1198, %v1199
    %v1201 = vmax.f32 %v1124, %v1125
    %v1202 = vrot.slane %v1201, 4
    %v1203 = vmax.f32 %v1201, %v1202
    %v1204 = vrot.slane %v1203, 2
    %v1205 = vmax.f32 %v1203, %v1204
    %v1206 = vrot.slane %v1205, 1
    %v1207 = vmax.f32 %v1205, %v1206
    %v1208 = vmax.f32 %v1126, %v1127
    %v1209 = vrot.slane %v1208, 4
    %v1210 = vmax.f32 %v1208, %v1209
    %v1211 = vrot.slane %v1210, 2
    %v1212 = vmax.f32 %v1210, %v1211
    %v1213 = vrot.slane %v1212, 1
    %v1214 = vmax.f32 %v1212, %v1213
    %v1215 = vmax.f32 %v1128, %v1129
    %v1216 = vrot.slane %v1215, 4
    %v1217 = vmax.f32 %v1215, %v1216
    %v1218 = vrot.slane %v1217, 2
    %v1219 = vmax.f32 %v1217, %v1218
    %v1220 = vrot.slane %v1219, 1
    %v1221 = vmax.f32 %v1219, %v1220
    %v1222 = vmax.f32 %v1130, %v1131
    %v1223 = vrot.slane %v1222, 4
    %v1224 = vmax.f32 %v1222, %v1223
    %v1225 = vrot.slane %v1224, 2
    %v1226 = vmax.f32 %v1224, %v1225
    %v1227 = vrot.slane %v1226, 1
    %v1228 = vmax.f32 %v1226, %v1227
    %v1229 = vmax.f32 %v1132, %v1133
    %v1230 = vrot.slane %v1229, 4
    %v1231 = vmax.f32 %v1229, %v1230
    %v1232 = vrot.slane %v1231, 2
    %v1233 = vmax.f32 %v1231, %v1232
    %v1234 = vrot.slane %v1233, 1
    %v1235 = vmax.f32 %v1233, %v1234
    %v1236 = vmax.f32 %v1134, %v1135
    %v1237 = vrot.slane %v1236, 4
    %v1238 = vmax.f32 %v1236, %v1237
    %v1239 = vrot.slane %v1238, 2
    %v1240 = vmax.f32 %v1238, %v1239
    %v1241 = vrot.slane %v1240, 1
    %v1242 = vmax.f32 %v1240, %v1241
    %v1243 = vmax.f32 %v1136, %v1137
    %v1244 = vrot.slane %v1243, 4
    %v1245 = vmax.f32 %v1243, %v1244
    %v1246 = vrot.slane %v1245, 2
    %v1247 = vmax.f32 %v1245, %v1246
    %v1248 = vrot.slane %v1247, 1
    %v1249 = vmax.f32 %v1247, %v1248
    %p1250 = scmp.le.s32.totalorder %s1093, %s1085
    %s1251 = scalar_select %p1250, 1, 0
    %v1252 = vstv %s1251
    %vm1253 = vcmp.eq.s32.totalorder %v1252, 1
    %v1254 = vsel %vm1253, 0.0, %v1144
    %v1255 = vsel %vm1253, 0.0, %v1151
    %v1256 = vsel %vm1253, 0.0, %v1158
    %v1257 = vsel %vm1253, 0.0, %v1165
    %v1258 = vsel %vm1253, 0.0, %v1172
    %v1259 = vsel %vm1253, 0.0, %v1179
    %v1260 = vsel %vm1253, 0.0, %v1186
    %v1261 = vsel %vm1253, 0.0, %v1193
    %v1262 = vsel %vm1253, 0.0, %v1200
    %v1263 = vsel %vm1253, 0.0, %v1207
    %v1264 = vsel %vm1253, 0.0, %v1214
    %v1265 = vsel %vm1253, 0.0, %v1221
    %v1266 = vsel %vm1253, 0.0, %v1228
    %v1267 = vsel %vm1253, 0.0, %v1235
    %v1268 = vsel %vm1253, 0.0, %v1242
    %v1269 = vsel %vm1253, 0.0, %v1249
    %s1270 = sfloor.f32 %s1086
    %s1271 = scvt.f32.s32.to.zero.pseudo %s1270
    %s1272 = sadd.s32 %s1271, %s268
    %p1273 = scmp.gt.s32.totalorder %s1272, 0
    %s1274 = scalar_select %p1273, %s1272, 0
    %p1275 = scmp.lt.s32.totalorder %s1274, 16
    %s1276 = scalar_select %p1275, %s1274, 16
    %s1277 = smul.f32 %s311, 6.0
    %s1278 = sceil.f32 %s1277
    %s1279 = scvt.f32.s32.to.zero.pseudo %s1278
    %s1280 = sadd.s32 %s1279, %s268
    %p1281 = scmp.gt.s32.totalorder %s1280, 0
    %s1282 = scalar_select %p1281, %s1280, 0
    %p1283 = scmp.lt.s32.totalorder %s1282, 16
    %s1284 = scalar_select %p1283, %s1282, 16
    %v1285 = vstv %s1276
    %vm1286 = vcmp.ge.s32.totalorder %v313, %v1285
    %vm1287 = vcmp.ge.s32.totalorder %v314, %v1285
    %v1288 = vstv %s1284
    %vm1289 = vcmp.lt.s32.totalorder %v313, %v1288
    %vm1290 = vcmp.lt.s32.totalorder %v314, %v1288
    %vm1291 = vmand %vm1286, %vm1289
    %vm1292 = vmand %vm1287, %vm1290
    %v1293 = vsel %vm1291, 1, 0
    %v1294 = vsel %vm1292, 1, 0
    %vm1295 = vcmp.eq.s32.totalorder %v1293, 1
    %vm1296 = vcmp.eq.s32.totalorder %v1294, 1
    %v1297 = vsel %vm1295, %v136, -inf
    %v1298 = vsel %vm1296, %v139, -inf
    %v1299 = vsel %vm1295, %v142, -inf
    %v1300 = vsel %vm1296, %v145, -inf
    %v1301 = vsel %vm1295, %v148, -inf
    %v1302 = vsel %vm1296, %v151, -inf
    %v1303 = vsel %vm1295, %v154, -inf
    %v1304 = vsel %vm1296, %v157, -inf
    %v1305 = vsel %vm1295, %v160, -inf
    %v1306 = vsel %vm1296, %v163, -inf
    %v1307 = vsel %vm1295, %v166, -inf
    %v1308 = vsel %vm1296, %v169, -inf
    %v1309 = vsel %vm1295, %v172, -inf
    %v1310 = vsel %vm1296, %v175, -inf
    %v1311 = vsel %vm1295, %v178, -inf
    %v1312 = vsel %vm1296, %v181, -inf
    %v1313 = vsel %vm1295, %v184, -inf
    %v1314 = vsel %vm1296, %v187, -inf
    %v1315 = vsel %vm1295, %v190, -inf
    %v1316 = vsel %vm1296, %v193, -inf
    %v1317 = vsel %vm1295, %v196, -inf
    %v1318 = vsel %vm1296, %v199, -inf
    %v1319 = vsel %vm1295, %v202, -inf
    %v1320 = vsel %vm1296, %v205, -inf
    %v1321 = vsel %vm1295, %v208, -inf
    %v1322 = vsel %vm1296, %v211, -inf
    %v1323 = vsel %vm1295, %v214, -inf
    %v1324 = vsel %vm1296, %v217, -inf
    %v1325 = vsel %vm1295, %v220, -inf
    %v1326 = vsel %vm1296, %v223, -inf
    %v1327 = vsel %vm1295, %v226, -inf
    %v1328 = vsel %vm1296, %v229, -inf
    %v1329 = vmax.f32 %v1297, %v1298
    %v1330 = vrot.slane %v1329, 4
    %v1331 = vmax.f32 %v1329, %v1330
    %v1332 = vrot.slane %v1331, 2
    %v1333 = vmax.f32 %v1331, %v1332
    %v1334 = vrot.slane %v1333, 1
    %v1335 = vmax.f32 %v1333, %v1334
    %v1336 = vmax.f32 %v1299, %v1300
    %v1337 = vrot.slane %v1336, 4
    %v1338 = vmax.f32 %v1336, %v1337
    %v1339 = vrot.slane %v1338, 2
    %v1340 = vmax.f32 %v1338, %v1339
    %v1341 = vrot.slane %v1340, 1
    %v1342 = vmax.f32 %v1340, %v1341
    %v1343 = vmax.f32 %v1301, %v1302
    %v1344 = vrot.slane %v1343, 4
    %v1345 = vmax.f32 %v1343, %v1344
    %v1346 = vrot.slane %v1345, 2
    %v1347 = vmax.f32 %v1345, %v1346
    %v1348 = vrot.slane %v1347, 1
    %v1349 = vmax.f32 %v1347, %v1348
    %v1350 = vmax.f32 %v1303, %v1304
    %v1351 = vrot.slane %v1350, 4
    %v1352 = vmax.f32 %v1350, %v1351
    %v1353 = vrot.slane %v1352, 2
    %v1354 = vmax.f32 %v1352, %v1353
    %v1355 = vrot.slane %v1354, 1
    %v1356 = vmax.f32 %v1354, %v1355
    %v1357 = vmax.f32 %v1305, %v1306
    %v1358 = vrot.slane %v1357, 4
    %v1359 = vmax.f32 %v1357, %v1358
    %v1360 = vrot.slane %v1359, 2
    %v1361 = vmax.f32 %v1359, %v1360
    %v1362 = vrot.slane %v1361, 1
    %v1363 = vmax.f32 %v1361, %v1362
    %v1364 = vmax.f32 %v1307, %v1308
    %v1365 = vrot.slane %v1364, 4
    %v1366 = vmax.f32 %v1364, %v1365
    %v1367 = vrot.slane %v1366, 2
    %v1368 = vmax.f32 %v1366, %v1367
    %v1369 = vrot.slane %v1368, 1
    %v1370 = vmax.f32 %v1368, %v1369
    %v1371 = vmax.f32 %v1309, %v1310
    %v1372 = vrot.slane %v1371, 4
    %v1373 = vmax.f32 %v1371, %v1372
    %v1374 = vrot.slane %v1373, 2
    %v1375 = vmax.f32 %v1373, %v1374
    %v1376 = vrot.slane %v1375, 1
    %v1377 = vmax.f32 %v1375, %v1376
    %v1378 = vmax.f32 %v1311, %v1312
    %v1379 = vrot.slane %v1378, 4
    %v1380 = vmax.f32 %v1378, %v1379
    %v1381 = vrot.slane %v1380, 2
    %v1382 = vmax.f32 %v1380, %v1381
    %v1383 = vrot.slane %v1382, 1
    %v1384 = vmax.f32 %v1382, %v1383
    %v1385 = vmax.f32 %v1313, %v1314
    %v1386 = vrot.slane %v1385, 4
    %v1387 = vmax.f32 %v1385, %v1386
    %v1388 = vrot.slane %v1387, 2
    %v1389 = vmax.f32 %v1387, %v1388
    %v1390 = vrot.slane %v1389, 1
    %v1391 = vmax.f32 %v1389, %v1390
    %v1392 = vmax.f32 %v1315, %v1316
    %v1393 = vrot.slane %v1392, 4
    %v1394 = vmax.f32 %v1392, %v1393
    %v1395 = vrot.slane %v1394, 2
    %v1396 = vmax.f32 %v1394, %v1395
    %v1397 = vrot.slane %v1396, 1
    %v1398 = vmax.f32 %v1396, %v1397
    %v1399 = vmax.f32 %v1317, %v1318
    %v1400 = vrot.slane %v1399, 4
    %v1401 = vmax.f32 %v1399, %v1400
    %v1402 = vrot.slane %v1401, 2
    %v1403 = vmax.f32 %v1401, %v1402
    %v1404 = vrot.slane %v1403, 1
    %v1405 = vmax.f32 %v1403, %v1404
    %v1406 = vmax.f32 %v1319, %v1320
    %v1407 = vrot.slane %v1406, 4
    %v1408 = vmax.f32 %v1406, %v1407
    %v1409 = vrot.slane %v1408, 2
    %v1410 = vmax.f32 %v1408, %v1409
    %v1411 = vrot.slane %v1410, 1
    %v1412 = vmax.f32 %v1410, %v1411
    %v1413 = vmax.f32 %v1321, %v1322
    %v1414 = vrot.slane %v1413, 4
    %v1415 = vmax.f32 %v1413, %v1414
    %v1416 = vrot.slane %v1415, 2
    %v1417 = vmax.f32 %v1415, %v1416
    %v1418 = vrot.slane %v1417, 1
    %v1419 = vmax.f32 %v1417, %v1418
    %v1420 = vmax.f32 %v1323, %v1324
    %v1421 = vrot.slane %v1420, 4
    %v1422 = vmax.f32 %v1420, %v1421
    %v1423 = vrot.slane %v1422, 2
    %v1424 = vmax.f32 %v1422, %v1423
    %v1425 = vrot.slane %v1424, 1
    %v1426 = vmax.f32 %v1424, %v1425
    %v1427 = vmax.f32 %v1325, %v1326
    %v1428 = vrot.slane %v1427, 4
    %v1429 = vmax.f32 %v1427, %v1428
    %v1430 = vrot.slane %v1429, 2
    %v1431 = vmax.f32 %v1429, %v1430
    %v1432 = vrot.slane %v1431, 1
    %v1433 = vmax.f32 %v1431, %v1432
    %v1434 = vmax.f32 %v1327, %v1328
    %v1435 = vrot.slane %v1434, 4
    %v1436 = vmax.f32 %v1434, %v1435
    %v1437 = vrot.slane %v1436, 2
    %v1438 = vmax.f32 %v1436, %v1437
    %v1439 = vrot.slane %v1438, 1
    %v1440 = vmax.f32 %v1438, %v1439
    %p1441 = scmp.le.s32.totalorder %s1284, %s1276
    %s1442 = scalar_select %p1441, 1, 0
    %v1443 = vstv %s1442
    %vm1444 = vcmp.eq.s32.totalorder %v1443, 1
    %v1445 = vsel %vm1444, 0.0, %v1335
    %v1446 = vsel %vm1444, 0.0, %v1342
    %v1447 = vsel %vm1444, 0.0, %v1349
    %v1448 = vsel %vm1444, 0.0, %v1356
    %v1449 = vsel %vm1444, 0.0, %v1363
    %v1450 = vsel %vm1444, 0.0, %v1370
    %v1451 = vsel %vm1444, 0.0, %v1377
    %v1452 = vsel %vm1444, 0.0, %v1384
    %v1453 = vsel %vm1444, 0.0, %v1391
    %v1454 = vsel %vm1444, 0.0, %v1398
    %v1455 = vsel %vm1444, 0.0, %v1405
    %v1456 = vsel %vm1444, 0.0, %v1412
    %v1457 = vsel %vm1444, 0.0, %v1419
    %v1458 = vsel %vm1444, 0.0, %v1426
    %v1459 = vsel %vm1444, 0.0, %v1433
    %v1460 = vsel %vm1444, 0.0, %v1440
    %s1461 = sfloor.f32 %s1277
    %s1462 = scvt.f32.s32.to.zero.pseudo %s1461
    %s1463 = sadd.s32 %s1462, %s268
    %p1464 = scmp.gt.s32.totalorder %s1463, 0
    %s1465 = scalar_select %p1464, %s1463, 0
    %p1466 = scmp.lt.s32.totalorder %s1465, 16
    %s1467 = scalar_select %p1466, %s1465, 16
    %s1468 = smul.f32 %s311, 7.0
    %s1469 = sceil.f32 %s1468
    %s1470 = scvt.f32.s32.to.zero.pseudo %s1469
    %s1471 = sadd.s32 %s1470, %s268
    %p1472 = scmp.gt.s32.totalorder %s1471, 0
    %s1473 = scalar_select %p1472, %s1471, 0
    %p1474 = scmp.lt.s32.totalorder %s1473, 16
    %s1475 = scalar_select %p1474, %s1473, 16
    %v1476 = vstv %s1467
    %vm1477 = vcmp.ge.s32.totalorder %v313, %v1476
    %vm1478 = vcmp.ge.s32.totalorder %v314, %v1476
    %v1479 = vstv %s1475
    %vm1480 = vcmp.lt.s32.totalorder %v313, %v1479
    %vm1481 = vcmp.lt.s32.totalorder %v314, %v1479
    %vm1482 = vmand %vm1477, %vm1480
    %vm1483 = vmand %vm1478, %vm1481
    %v1484 = vsel %vm1482, 1, 0
    %v1485 = vsel %vm1483, 1, 0
    %vm1486 = vcmp.eq.s32.totalorder %v1484, 1
    %vm1487 = vcmp.eq.s32.totalorder %v1485, 1
    %v1488 = vsel %vm1486, %v136, -inf
    %v1489 = vsel %vm1487, %v139, -inf
    %v1490 = vsel %vm1486, %v142, -inf
    %v1491 = vsel %vm1487, %v145, -inf
    %v1492 = vsel %vm1486, %v148, -inf
    %v1493 = vsel %vm1487, %v151, -inf
    %v1494 = vsel %vm1486, %v154, -inf
    %v1495 = vsel %vm1487, %v157, -inf
    %v1496 = vsel %vm1486, %v160, -inf
    %v1497 = vsel %vm1487, %v163, -inf
    %v1498 = vsel %vm1486, %v166, -inf
    %v1499 = vsel %vm1487, %v169, -inf
    %v1500 = vsel %vm1486, %v172, -inf
    %v1501 = vsel %vm1487, %v175, -inf
    %v1502 = vsel %vm1486, %v178, -inf
    %v1503 = vsel %vm1487, %v181, -inf
    %v1504 = vsel %vm1486, %v184, -inf
    %v1505 = vsel %vm1487, %v187, -inf
    %v1506 = vsel %vm1486, %v190, -inf
    %v1507 = vsel %vm1487, %v193, -inf
    %v1508 = vsel %vm1486, %v196, -inf
    %v1509 = vsel %vm1487, %v199, -inf
    %v1510 = vsel %vm1486, %v202, -inf
    %v1511 = vsel %vm1487, %v205, -inf
    %v1512 = vsel %vm1486, %v208, -inf
    %v1513 = vsel %vm1487, %v211, -inf
    %v1514 = vsel %vm1486, %v214, -inf
    %v1515 = vsel %vm1487, %v217, -inf
    %v1516 = vsel %vm1486, %v220, -inf
    %v1517 = vsel %vm1487, %v223, -inf
    %v1518 = vsel %vm1486, %v226, -inf
    %v1519 = vsel %vm1487, %v229, -inf
    %v1520 = vmax.f32 %v1488, %v1489
    %v1521 = vrot.slane %v1520, 4
    %v1522 = vmax.f32 %v1520, %v1521
    %v1523 = vrot.slane %v1522, 2
    %v1524 = vmax.f32 %v1522, %v1523
    %v1525 = vrot.slane %v1524, 1
    %v1526 = vmax.f32 %v1524, %v1525
    %v1527 = vmax.f32 %v1490, %v1491
    %v1528 = vrot.slane %v1527, 4
    %v1529 = vmax.f32 %v1527, %v1528
    %v1530 = vrot.slane %v1529, 2
    %v1531 = vmax.f32 %v1529, %v1530
    %v1532 = vrot.slane %v1531, 1
    %v1533 = vmax.f32 %v1531, %v1532
    %v1534 = vmax.f32 %v1492, %v1493
    %v1535 = vrot.slane %v1534, 4
    %v1536 = vmax.f32 %v1534, %v1535
    %v1537 = vrot.slane %v1536, 2
    %v1538 = vmax.f32 %v1536, %v1537
    %v1539 = vrot.slane %v1538, 1
    %v1540 = vmax.f32 %v1538, %v1539
    %v1541 = vmax.f32 %v1494, %v1495
    %v1542 = vrot.slane %v1541, 4
    %v1543 = vmax.f32 %v1541, %v1542
    %v1544 = vrot.slane %v1543, 2
    %v1545 = vmax.f32 %v1543, %v1544
    %v1546 = vrot.slane %v1545, 1
    %v1547 = vmax.f32 %v1545, %v1546
    %v1548 = vmax.f32 %v1496, %v1497
    %v1549 = vrot.slane %v1548, 4
    %v1550 = vmax.f32 %v1548, %v1549
    %v1551 = vrot.slane %v1550, 2
    %v1552 = vmax.f32 %v1550, %v1551
    %v1553 = vrot.slane %v1552, 1
    %v1554 = vmax.f32 %v1552, %v1553
    %v1555 = vmax.f32 %v1498, %v1499
    %v1556 = vrot.slane %v1555, 4
    %v1557 = vmax.f32 %v1555, %v1556
    %v1558 = vrot.slane %v1557, 2
    %v1559 = vmax.f32 %v1557, %v1558
    %v1560 = vrot.slane %v1559, 1
    %v1561 = vmax.f32 %v1559, %v1560
    %v1562 = vmax.f32 %v1500, %v1501
    %v1563 = vrot.slane %v1562, 4
    %v1564 = vmax.f32 %v1562, %v1563
    %v1565 = vrot.slane %v1564, 2
    %v1566 = vmax.f32 %v1564, %v1565
    %v1567 = vrot.slane %v1566, 1
    %v1568 = vmax.f32 %v1566, %v1567
    %v1569 = vmax.f32 %v1502, %v1503
    %v1570 = vrot.slane %v1569, 4
    %v1571 = vmax.f32 %v1569, %v1570
    %v1572 = vrot.slane %v1571, 2
    %v1573 = vmax.f32 %v1571, %v1572
    %v1574 = vrot.slane %v1573, 1
    %v1575 = vmax.f32 %v1573, %v1574
    %v1576 = vmax.f32 %v1504, %v1505
    %v1577 = vrot.slane %v1576, 4
    %v1578 = vmax.f32 %v1576, %v1577
    %v1579 = vrot.slane %v1578, 2
    %v1580 = vmax.f32 %v1578, %v1579
    %v1581 = vrot.slane %v1580, 1
    %v1582 = vmax.f32 %v1580, %v1581
    %v1583 = vmax.f32 %v1506, %v1507
    %v1584 = vrot.slane %v1583, 4
    %v1585 = vmax.f32 %v1583, %v1584
    %v1586 = vrot.slane %v1585, 2
    %v1587 = vmax.f32 %v1585, %v1586
    %v1588 = vrot.slane %v1587, 1
    %v1589 = vmax.f32 %v1587, %v1588
    %v1590 = vmax.f32 %v1508, %v1509
    %v1591 = vrot.slane %v1590, 4
    %v1592 = vmax.f32 %v1590, %v1591
    %v1593 = vrot.slane %v1592, 2
    %v1594 = vmax.f32 %v1592, %v1593
    %v1595 = vrot.slane %v1594, 1
    %v1596 = vmax.f32 %v1594, %v1595
    %v1597 = vmax.f32 %v1510, %v1511
    %v1598 = vrot.slane %v1597, 4
    %v1599 = vmax.f32 %v1597, %v1598
    %v1600 = vrot.slane %v1599, 2
    %v1601 = vmax.f32 %v1599, %v1600
    %v1602 = vrot.slane %v1601, 1
    %v1603 = vmax.f32 %v1601, %v1602
    %v1604 = vmax.f32 %v1512, %v1513
    %v1605 = vrot.slane %v1604, 4
    %v1606 = vmax.f32 %v1604, %v1605
    %v1607 = vrot.slane %v1606, 2
    %v1608 = vmax.f32 %v1606, %v1607
    %v1609 = vrot.slane %v1608, 1
    %v1610 = vmax.f32 %v1608, %v1609
    %v1611 = vmax.f32 %v1514, %v1515
    %v1612 = vrot.slane %v1611, 4
    %v1613 = vmax.f32 %v1611, %v1612
    %v1614 = vrot.slane %v1613, 2
    %v1615 = vmax.f32 %v1613, %v1614
    %v1616 = vrot.slane %v1615, 1
    %v1617 = vmax.f32 %v1615, %v1616
    %v1618 = vmax.f32 %v1516, %v1517
    %v1619 = vrot.slane %v1618, 4
    %v1620 = vmax.f32 %v1618, %v1619
    %v1621 = vrot.slane %v1620, 2
    %v1622 = vmax.f32 %v1620, %v1621
    %v1623 = vrot.slane %v1622, 1
    %v1624 = vmax.f32 %v1622, %v1623
    %v1625 = vmax.f32 %v1518, %v1519
    %v1626 = vrot.slane %v1625, 4
    %v1627 = vmax.f32 %v1625, %v1626
    %v1628 = vrot.slane %v1627, 2
    %v1629 = vmax.f32 %v1627, %v1628
    %v1630 = vrot.slane %v1629, 1
    %v1631 = vmax.f32 %v1629, %v1630
    %p1632 = scmp.le.s32.totalorder %s1475, %s1467
    %s1633 = scalar_select %p1632, 1, 0
    %v1634 = vstv %s1633
    %vm1635 = vcmp.eq.s32.totalorder %v1634, 1
    %v1636 = vsel %vm1635, 0.0, %v1526
    %v1637 = vsel %vm1635, 0.0, %v1533
    %v1638 = vsel %vm1635, 0.0, %v1540
    %v1639 = vsel %vm1635, 0.0, %v1547
    %v1640 = vsel %vm1635, 0.0, %v1554
    %v1641 = vsel %vm1635, 0.0, %v1561
    %v1642 = vsel %vm1635, 0.0, %v1568
    %v1643 = vsel %vm1635, 0.0, %v1575
    %v1644 = vsel %vm1635, 0.0, %v1582
    %v1645 = vsel %vm1635, 0.0, %v1589
    %v1646 = vsel %vm1635, 0.0, %v1596
    %v1647 = vsel %vm1635, 0.0, %v1603
    %v1648 = vsel %vm1635, 0.0, %v1610
    %v1649 = vsel %vm1635, 0.0, %v1617
    %v1650 = vsel %vm1635, 0.0, %v1624
    %v1651 = vsel %vm1635, 0.0, %v1631
    %vm1668 = vcmask 1041409
    %v1669 = vsel %vm1668, %v491, %v490
    %vm1670 = vcmask 1042434
    %v1671 = vsel %vm1670, %v492, %v1669
    %vm1672 = vcmask 1043459
    %v1673 = vsel %vm1672, %v493, %v1671
    %vm1674 = vcmask 1044484
    %v1675 = vsel %vm1674, %v494, %v1673
    %vm1676 = vcmask 1045509
    %v1677 = vsel %vm1676, %v495, %v1675
    %vm1678 = vcmask 1046534
    %v1679 = vsel %vm1678, %v496, %v1677
    %vm1680 = vcmask 1047559
    %v1681 = vsel %vm1680, %v497, %v1679
    %v1682 = vsel %vm1668, %v499, %v498
    %v1683 = vsel %vm1670, %v500, %v1682
    %v1684 = vsel %vm1672, %v501, %v1683
    %v1685 = vsel %vm1674, %v502, %v1684
    %v1686 = vsel %vm1676, %v503, %v1685
    %v1687 = vsel %vm1678, %v504, %v1686
    %v1688 = vsel %vm1680, %v505, %v1687
    %v1707 = vsel %vm1668, %v682, %v681
    %v1708 = vsel %vm1670, %v683, %v1707
    %v1709 = vsel %vm1672, %v684, %v1708
    %v1710 = vsel %vm1674, %v685, %v1709
    %v1711 = vsel %vm1676, %v686, %v1710
    %v1712 = vsel %vm1678, %v687, %v1711
    %v1713 = vsel %vm1680, %v688, %v1712
    %v1714 = vsel %vm1668, %v690, %v689
    %v1715 = vsel %vm1670, %v691, %v1714
    %v1716 = vsel %vm1672, %v692, %v1715
    %v1717 = vsel %vm1674, %v693, %v1716
    %v1718 = vsel %vm1676, %v694, %v1717
    %v1719 = vsel %vm1678, %v695, %v1718
    %v1720 = vsel %vm1680, %v696, %v1719
    %v1739 = vsel %vm1668, %v873, %v872
    %v1740 = vsel %vm1670, %v874, %v1739
    %v1741 = vsel %vm1672, %v875, %v1740
    %v1742 = vsel %vm1674, %v876, %v1741
    %v1743 = vsel %vm1676, %v877, %v1742
    %v1744 = vsel %vm1678, %v878, %v1743
    %v1745 = vsel %vm1680, %v879, %v1744
    %v1746 = vsel %vm1668, %v881, %v880
    %v1747 = vsel %vm1670, %v882, %v1746
    %v1748 = vsel %vm1672, %v883, %v1747
    %v1749 = vsel %vm1674, %v884, %v1748
    %v1750 = vsel %vm1676, %v885, %v1749
    %v1751 = vsel %vm1678, %v886, %v1750
    %v1752 = vsel %vm1680, %v887, %v1751
    %v1771 = vsel %vm1668, %v1064, %v1063
    %v1772 = vsel %vm1670, %v1065, %v1771
    %v1773 = vsel %vm1672, %v1066, %v1772
    %v1774 = vsel %vm1674, %v1067, %v1773
    %v1775 = vsel %vm1676, %v1068, %v1774
    %v1776 = vsel %vm1678, %v1069, %v1775
    %v1777 = vsel %vm1680, %v1070, %v1776
    %v1778 = vsel %vm1668, %v1072, %v1071
    %v1779 = vsel %vm1670, %v1073, %v1778
    %v1780 = vsel %vm1672, %v1074, %v1779
    %v1781 = vsel %vm1674, %v1075, %v1780
    %v1782 = vsel %vm1676, %v1076, %v1781
    %v1783 = vsel %vm1678, %v1077, %v1782
    %v1784 = vsel %vm1680, %v1078, %v1783
    %v1803 = vsel %vm1668, %v1255, %v1254
    %v1804 = vsel %vm1670, %v1256, %v1803
    %v1805 = vsel %vm1672, %v1257, %v1804
    %v1806 = vsel %vm1674, %v1258, %v1805
    %v1807 = vsel %vm1676, %v1259, %v1806
    %v1808 = vsel %vm1678, %v1260, %v1807
    %v1809 = vsel %vm1680, %v1261, %v1808
    %v1810 = vsel %vm1668, %v1263, %v1262
    %v1811 = vsel %vm1670, %v1264, %v1810
    %v1812 = vsel %vm1672, %v1265, %v1811
    %v1813 = vsel %vm1674, %v1266, %v1812
    %v1814 = vsel %vm1676, %v1267, %v1813
    %v1815 = vsel %vm1678, %v1268, %v1814
    %v1816 = vsel %vm1680, %v1269, %v1815
    %v1835 = vsel %vm1668, %v1446, %v1445
    %v1836 = vsel %vm1670, %v1447, %v1835
    %v1837 = vsel %vm1672, %v1448, %v1836
    %v1838 = vsel %vm1674, %v1449, %v1837
    %v1839 = vsel %vm1676, %v1450, %v1838
    %v1840 = vsel %vm1678, %v1451, %v1839
    %v1841 = vsel %vm1680, %v1452, %v1840
    %v1842 = vsel %vm1668, %v1454, %v1453
    %v1843 = vsel %vm1670, %v1455, %v1842
    %v1844 = vsel %vm1672, %v1456, %v1843
    %v1845 = vsel %vm1674, %v1457, %v1844
    %v1846 = vsel %vm1676, %v1458, %v1845
    %v1847 = vsel %vm1678, %v1459, %v1846
    %v1848 = vsel %vm1680, %v1460, %v1847
    %v1867 = vsel %vm1668, %v1637, %v1636
    %v1868 = vsel %vm1670, %v1638, %v1867
    %v1869 = vsel %vm1672, %v1639, %v1868
    %v1870 = vsel %vm1674, %v1640, %v1869
    %v1871 = vsel %vm1676, %v1641, %v1870
    %v1872 = vsel %vm1678, %v1642, %v1871
    %v1873 = vsel %vm1680, %v1643, %v1872
    %v1874 = vsel %vm1668, %v1645, %v1644
    %v1875 = vsel %vm1670, %v1646, %v1874
    %v1876 = vsel %vm1672, %v1647, %v1875
    %v1877 = vsel %vm1674, %v1648, %v1876
    %v1878 = vsel %vm1676, %v1649, %v1877
    %v1879 = vsel %vm1678, %v1650, %v1878
    %v1880 = vsel %vm1680, %v1651, %v1879
    %s1883 = smul.f32 %s301, 0.0
    %s1884 = sfloor.f32 %s1883
    %s1885 = scvt.f32.s32.to.zero.pseudo %s1884
    %s1886 = sadd.s32 %s1885, %s273
    %p1887 = scmp.gt.s32.totalorder %s1886, 0
    %s1888 = scalar_select %p1887, %s1886, 0
    %p1889 = scmp.lt.s32.totalorder %s1888, 16
    %s1890 = scalar_select %p1889, %s1888, 16
    %s1891 = sceil.f32 %s301
    %s1892 = scvt.f32.s32.to.zero.pseudo %s1891
    %s1893 = sadd.s32 %s1892, %s273
    %p1894 = scmp.gt.s32.totalorder %s1893, 0
    %s1895 = scalar_select %p1894, %s1893, 0
    %p1896 = scmp.lt.s32.totalorder %s1895, 16
    %s1897 = scalar_select %p1896, %s1895, 16
    %v1898 = vstv %s1890
    %vm1899 = vcmp.ge.s32.totalorder %v313, %v1898
    %vm1900 = vcmp.ge.s32.totalorder %v314, %v1898
    %v1901 = vstv %s1897
    %vm1902 = vcmp.lt.s32.totalorder %v313, %v1901
    %vm1903 = vcmp.lt.s32.totalorder %v314, %v1901
    %vm1904 = vmand %vm1899, %vm1902
    %vm1905 = vmand %vm1900, %vm1903
    %v1906 = vsel %vm1904, 1, 0
    %v1907 = vsel %vm1905, 1, 0
    %vm1908 = vcmp.eq.s32.totalorder %v1906, 1
    %vm1909 = vcmp.eq.s32.totalorder %v1907, 1
    %v1910 = vsel %vm1908, %v1681, -inf
    %v1911 = vsel %vm1908, %v1713, -inf
    %v1912 = vsel %vm1908, %v1745, -inf
    %v1913 = vsel %vm1908, %v1777, -inf
    %v1914 = vsel %vm1908, %v1809, -inf
    %v1915 = vsel %vm1908, %v1841, -inf
    %v1916 = vsel %vm1908, %v1873, -inf
    %v1917 = vsel %vm1909, %v1688, -inf
    %v1918 = vsel %vm1909, %v1720, -inf
    %v1919 = vsel %vm1909, %v1752, -inf
    %v1920 = vsel %vm1909, %v1784, -inf
    %v1921 = vsel %vm1909, %v1816, -inf
    %v1922 = vsel %vm1909, %v1848, -inf
    %v1923 = vsel %vm1909, %v1880, -inf
    %v1924 = vmax.f32 %v1910, %v1917
    %v1925 = vrot.slane %v1924, 4
    %v1926 = vmax.f32 %v1924, %v1925
    %v1927 = vrot.slane %v1926, 2
    %v1928 = vmax.f32 %v1926, %v1927
    %v1929 = vrot.slane %v1928, 1
    %v1930 = vmax.f32 %v1928, %v1929
    %v1931 = vmax.f32 %v1911, %v1918
    %v1932 = vrot.slane %v1931, 4
    %v1933 = vmax.f32 %v1931, %v1932
    %v1934 = vrot.slane %v1933, 2
    %v1935 = vmax.f32 %v1933, %v1934
    %v1936 = vrot.slane %v1935, 1
    %v1937 = vmax.f32 %v1935, %v1936
    %v1938 = vmax.f32 %v1912, %v1919
    %v1939 = vrot.slane %v1938, 4
    %v1940 = vmax.f32 %v1938, %v1939
    %v1941 = vrot.slane %v1940, 2
    %v1942 = vmax.f32 %v1940, %v1941
    %v1943 = vrot.slane %v1942, 1
    %v1944 = vmax.f32 %v1942, %v1943
    %v1945 = vmax.f32 %v1913, %v1920
    %v1946 = vrot.slane %v1945, 4
    %v1947 = vmax.f32 %v1945, %v1946
    %v1948 = vrot.slane %v1947, 2
    %v1949 = vmax.f32 %v1947, %v1948
    %v1950 = vrot.slane %v1949, 1
    %v1951 = vmax.f32 %v1949, %v1950
    %v1952 = vmax.f32 %v1914, %v1921
    %v1953 = vrot.slane %v1952, 4
    %v1954 = vmax.f32 %v1952, %v1953
    %v1955 = vrot.slane %v1954, 2
    %v1956 = vmax.f32 %v1954, %v1955
    %v1957 = vrot.slane %v1956, 1
    %v1958 = vmax.f32 %v1956, %v1957
    %v1959 = vmax.f32 %v1915, %v1922
    %v1960 = vrot.slane %v1959, 4
    %v1961 = vmax.f32 %v1959, %v1960
    %v1962 = vrot.slane %v1961, 2
    %v1963 = vmax.f32 %v1961, %v1962
    %v1964 = vrot.slane %v1963, 1
    %v1965 = vmax.f32 %v1963, %v1964
    %v1966 = vmax.f32 %v1916, %v1923
    %v1967 = vrot.slane %v1966, 4
    %v1968 = vmax.f32 %v1966, %v1967
    %v1969 = vrot.slane %v1968, 2
    %v1970 = vmax.f32 %v1968, %v1969
    %v1971 = vrot.slane %v1970, 1
    %v1972 = vmax.f32 %v1970, %v1971
    %p1973 = scmp.le.s32.totalorder %s1897, %s1890
    %s1974 = scalar_select %p1973, 1, 0
    %v1975 = vstv %s1974
    %vm1976 = vcmp.eq.s32.totalorder %v1975, 1
    %v1977 = vsel %vm1976, 0.0, %v1930
    %v1978 = vsel %vm1976, 0.0, %v1937
    %v1979 = vsel %vm1976, 0.0, %v1944
    %v1980 = vsel %vm1976, 0.0, %v1951
    %v1981 = vsel %vm1976, 0.0, %v1958
    %v1982 = vsel %vm1976, 0.0, %v1965
    %v1983 = vsel %vm1976, 0.0, %v1972
    %s1984 = sfloor.f32 %s301
    %s1985 = scvt.f32.s32.to.zero.pseudo %s1984
    %s1986 = sadd.s32 %s1985, %s273
    %p1987 = scmp.gt.s32.totalorder %s1986, 0
    %s1988 = scalar_select %p1987, %s1986, 0
    %p1989 = scmp.lt.s32.totalorder %s1988, 16
    %s1990 = scalar_select %p1989, %s1988, 16
    %s1991 = smul.f32 %s301, 2.0
    %s1992 = sceil.f32 %s1991
    %s1993 = scvt.f32.s32.to.zero.pseudo %s1992
    %s1994 = sadd.s32 %s1993, %s273
    %p1995 = scmp.gt.s32.totalorder %s1994, 0
    %s1996 = scalar_select %p1995, %s1994, 0
    %p1997 = scmp.lt.s32.totalorder %s1996, 16
    %s1998 = scalar_select %p1997, %s1996, 16
    %v1999 = vstv %s1990
    %vm2000 = vcmp.ge.s32.totalorder %v313, %v1999
    %vm2001 = vcmp.ge.s32.totalorder %v314, %v1999
    %v2002 = vstv %s1998
    %vm2003 = vcmp.lt.s32.totalorder %v313, %v2002
    %vm2004 = vcmp.lt.s32.totalorder %v314, %v2002
    %vm2005 = vmand %vm2000, %vm2003
    %vm2006 = vmand %vm2001, %vm2004
    %v2007 = vsel %vm2005, 1, 0
    %v2008 = vsel %vm2006, 1, 0
    %vm2009 = vcmp.eq.s32.totalorder %v2007, 1
    %vm2010 = vcmp.eq.s32.totalorder %v2008, 1
    %v2011 = vsel %vm2009, %v1681, -inf
    %v2012 = vsel %vm2009, %v1713, -inf
    %v2013 = vsel %vm2009, %v1745, -inf
    %v2014 = vsel %vm2009, %v1777, -inf
    %v2015 = vsel %vm2009, %v1809, -inf
    %v2016 = vsel %vm2009, %v1841, -inf
    %v2017 = vsel %vm2009, %v1873, -inf
    %v2018 = vsel %vm2010, %v1688, -inf
    %v2019 = vsel %vm2010, %v1720, -inf
    %v2020 = vsel %vm2010, %v1752, -inf
    %v2021 = vsel %vm2010, %v1784, -inf
    %v2022 = vsel %vm2010, %v1816, -inf
    %v2023 = vsel %vm2010, %v1848, -inf
    %v2024 = vsel %vm2010, %v1880, -inf
    %v2025 = vmax.f32 %v2011, %v2018
    %v2026 = vrot.slane %v2025, 4
    %v2027 = vmax.f32 %v2025, %v2026
    %v2028 = vrot.slane %v2027, 2
    %v2029 = vmax.f32 %v2027, %v2028
    %v2030 = vrot.slane %v2029, 1
    %v2031 = vmax.f32 %v2029, %v2030
    %v2032 = vmax.f32 %v2012, %v2019
    %v2033 = vrot.slane %v2032, 4
    %v2034 = vmax.f32 %v2032, %v2033
    %v2035 = vrot.slane %v2034, 2
    %v2036 = vmax.f32 %v2034, %v2035
    %v2037 = vrot.slane %v2036, 1
    %v2038 = vmax.f32 %v2036, %v2037
    %v2039 = vmax.f32 %v2013, %v2020
    %v2040 = vrot.slane %v2039, 4
    %v2041 = vmax.f32 %v2039, %v2040
    %v2042 = vrot.slane %v2041, 2
    %v2043 = vmax.f32 %v2041, %v2042
    %v2044 = vrot.slane %v2043, 1
    %v2045 = vmax.f32 %v2043, %v2044
    %v2046 = vmax.f32 %v2014, %v2021
    %v2047 = vrot.slane %v2046, 4
    %v2048 = vmax.f32 %v2046, %v2047
    %v2049 = vrot.slane %v2048, 2
    %v2050 = vmax.f32 %v2048, %v2049
    %v2051 = vrot.slane %v2050, 1
    %v2052 = vmax.f32 %v2050, %v2051
    %v2053 = vmax.f32 %v2015, %v2022
    %v2054 = vrot.slane %v2053, 4
    %v2055 = vmax.f32 %v2053, %v2054
    %v2056 = vrot.slane %v2055, 2
    %v2057 = vmax.f32 %v2055, %v2056
    %v2058 = vrot.slane %v2057, 1
    %v2059 = vmax.f32 %v2057, %v2058
    %v2060 = vmax.f32 %v2016, %v2023
    %v2061 = vrot.slane %v2060, 4
    %v2062 = vmax.f32 %v2060, %v2061
    %v2063 = vrot.slane %v2062, 2
    %v2064 = vmax.f32 %v2062, %v2063
    %v2065 = vrot.slane %v2064, 1
    %v2066 = vmax.f32 %v2064, %v2065
    %v2067 = vmax.f32 %v2017, %v2024
    %v2068 = vrot.slane %v2067, 4
    %v2069 = vmax.f32 %v2067, %v2068
    %v2070 = vrot.slane %v2069, 2
    %v2071 = vmax.f32 %v2069, %v2070
    %v2072 = vrot.slane %v2071, 1
    %v2073 = vmax.f32 %v2071, %v2072
    %p2074 = scmp.le.s32.totalorder %s1998, %s1990
    %s2075 = scalar_select %p2074, 1, 0
    %v2076 = vstv %s2075
    %vm2077 = vcmp.eq.s32.totalorder %v2076, 1
    %v2078 = vsel %vm2077, 0.0, %v2031
    %v2079 = vsel %vm2077, 0.0, %v2038
    %v2080 = vsel %vm2077, 0.0, %v2045
    %v2081 = vsel %vm2077, 0.0, %v2052
    %v2082 = vsel %vm2077, 0.0, %v2059
    %v2083 = vsel %vm2077, 0.0, %v2066
    %v2084 = vsel %vm2077, 0.0, %v2073
    %s2085 = sfloor.f32 %s1991
    %s2086 = scvt.f32.s32.to.zero.pseudo %s2085
    %s2087 = sadd.s32 %s2086, %s273
    %p2088 = scmp.gt.s32.totalorder %s2087, 0
    %s2089 = scalar_select %p2088, %s2087, 0
    %p2090 = scmp.lt.s32.totalorder %s2089, 16
    %s2091 = scalar_select %p2090, %s2089, 16
    %s2092 = smul.f32 %s301, 3.0
    %s2093 = sceil.f32 %s2092
    %s2094 = scvt.f32.s32.to.zero.pseudo %s2093
    %s2095 = sadd.s32 %s2094, %s273
    %p2096 = scmp.gt.s32.totalorder %s2095, 0
    %s2097 = scalar_select %p2096, %s2095, 0
    %p2098 = scmp.lt.s32.totalorder %s2097, 16
    %s2099 = scalar_select %p2098, %s2097, 16
    %v2100 = vstv %s2091
    %vm2101 = vcmp.ge.s32.totalorder %v313, %v2100
    %vm2102 = vcmp.ge.s32.totalorder %v314, %v2100
    %v2103 = vstv %s2099
    %vm2104 = vcmp.lt.s32.totalorder %v313, %v2103
    %vm2105 = vcmp.lt.s32.totalorder %v314, %v2103
    %vm2106 = vmand %vm2101, %vm2104
    %vm2107 = vmand %vm2102, %vm2105
    %v2108 = vsel %vm2106, 1, 0
    %v2109 = vsel %vm2107, 1, 0
    %vm2110 = vcmp.eq.s32.totalorder %v2108, 1
    %vm2111 = vcmp.eq.s32.totalorder %v2109, 1
    %v2112 = vsel %vm2110, %v1681, -inf
    %v2113 = vsel %vm2110, %v1713, -inf
    %v2114 = vsel %vm2110, %v1745, -inf
    %v2115 = vsel %vm2110, %v1777, -inf
    %v2116 = vsel %vm2110, %v1809, -inf
    %v2117 = vsel %vm2110, %v1841, -inf
    %v2118 = vsel %vm2110, %v1873, -inf
    %v2119 = vsel %vm2111, %v1688, -inf
    %v2120 = vsel %vm2111, %v1720, -inf
    %v2121 = vsel %vm2111, %v1752, -inf
    %v2122 = vsel %vm2111, %v1784, -inf
    %v2123 = vsel %vm2111, %v1816, -inf
    %v2124 = vsel %vm2111, %v1848, -inf
    %v2125 = vsel %vm2111, %v1880, -inf
    %v2126 = vmax.f32 %v2112, %v2119
    %v2127 = vrot.slane %v2126, 4
    %v2128 = vmax.f32 %v2126, %v2127
    %v2129 = vrot.slane %v2128, 2
    %v2130 = vmax.f32 %v2128, %v2129
    %v2131 = vrot.slane %v2130, 1
    %v2132 = vmax.f32 %v2130, %v2131
    %v2133 = vmax.f32 %v2113, %v2120
    %v2134 = vrot.slane %v2133, 4
    %v2135 = vmax.f32 %v2133, %v2134
    %v2136 = vrot.slane %v2135, 2
    %v2137 = vmax.f32 %v2135, %v2136
    %v2138 = vrot.slane %v2137, 1
    %v2139 = vmax.f32 %v2137, %v2138
    %v2140 = vmax.f32 %v2114, %v2121
    %v2141 = vrot.slane %v2140, 4
    %v2142 = vmax.f32 %v2140, %v2141
    %v2143 = vrot.slane %v2142, 2
    %v2144 = vmax.f32 %v2142, %v2143
    %v2145 = vrot.slane %v2144, 1
    %v2146 = vmax.f32 %v2144, %v2145
    %v2147 = vmax.f32 %v2115, %v2122
    %v2148 = vrot.slane %v2147, 4
    %v2149 = vmax.f32 %v2147, %v2148
    %v2150 = vrot.slane %v2149, 2
    %v2151 = vmax.f32 %v2149, %v2150
    %v2152 = vrot.slane %v2151, 1
    %v2153 = vmax.f32 %v2151, %v2152
    %v2154 = vmax.f32 %v2116, %v2123
    %v2155 = vrot.slane %v2154, 4
    %v2156 = vmax.f32 %v2154, %v2155
    %v2157 = vrot.slane %v2156, 2
    %v2158 = vmax.f32 %v2156, %v2157
    %v2159 = vrot.slane %v2158, 1
    %v2160 = vmax.f32 %v2158, %v2159
    %v2161 = vmax.f32 %v2117, %v2124
    %v2162 = vrot.slane %v2161, 4
    %v2163 = vmax.f32 %v2161, %v2162
    %v2164 = vrot.slane %v2163, 2
    %v2165 = vmax.f32 %v2163, %v2164
    %v2166 = vrot.slane %v2165, 1
    %v2167 = vmax.f32 %v2165, %v2166
    %v2168 = vmax.f32 %v2118, %v2125
    %v2169 = vrot.slane %v2168, 4
    %v2170 = vmax.f32 %v2168, %v2169
    %v2171 = vrot.slane %v2170, 2
    %v2172 = vmax.f32 %v2170, %v2171
    %v2173 = vrot.slane %v2172, 1
    %v2174 = vmax.f32 %v2172, %v2173
    %p2175 = scmp.le.s32.totalorder %s2099, %s2091
    %s2176 = scalar_select %p2175, 1, 0
    %v2177 = vstv %s2176
    %vm2178 = vcmp.eq.s32.totalorder %v2177, 1
    %v2179 = vsel %vm2178, 0.0, %v2132
    %v2180 = vsel %vm2178, 0.0, %v2139
    %v2181 = vsel %vm2178, 0.0, %v2146
    %v2182 = vsel %vm2178, 0.0, %v2153
    %v2183 = vsel %vm2178, 0.0, %v2160
    %v2184 = vsel %vm2178, 0.0, %v2167
    %v2185 = vsel %vm2178, 0.0, %v2174
    %s2186 = sfloor.f32 %s2092
    %s2187 = scvt.f32.s32.to.zero.pseudo %s2186
    %s2188 = sadd.s32 %s2187, %s273
    %p2189 = scmp.gt.s32.totalorder %s2188, 0
    %s2190 = scalar_select %p2189, %s2188, 0
    %p2191 = scmp.lt.s32.totalorder %s2190, 16
    %s2192 = scalar_select %p2191, %s2190, 16
    %s2193 = smul.f32 %s301, 4.0
    %s2194 = sceil.f32 %s2193
    %s2195 = scvt.f32.s32.to.zero.pseudo %s2194
    %s2196 = sadd.s32 %s2195, %s273
    %p2197 = scmp.gt.s32.totalorder %s2196, 0
    %s2198 = scalar_select %p2197, %s2196, 0
    %p2199 = scmp.lt.s32.totalorder %s2198, 16
    %s2200 = scalar_select %p2199, %s2198, 16
    %v2201 = vstv %s2192
    %vm2202 = vcmp.ge.s32.totalorder %v313, %v2201
    %vm2203 = vcmp.ge.s32.totalorder %v314, %v2201
    %v2204 = vstv %s2200
    %vm2205 = vcmp.lt.s32.totalorder %v313, %v2204
    %vm2206 = vcmp.lt.s32.totalorder %v314, %v2204
    %vm2207 = vmand %vm2202, %vm2205
    %vm2208 = vmand %vm2203, %vm2206
    %v2209 = vsel %vm2207, 1, 0
    %v2210 = vsel %vm2208, 1, 0
    %vm2211 = vcmp.eq.s32.totalorder %v2209, 1
    %vm2212 = vcmp.eq.s32.totalorder %v2210, 1
    %v2213 = vsel %vm2211, %v1681, -inf
    %v2214 = vsel %vm2211, %v1713, -inf
    %v2215 = vsel %vm2211, %v1745, -inf
    %v2216 = vsel %vm2211, %v1777, -inf
    %v2217 = vsel %vm2211, %v1809, -inf
    %v2218 = vsel %vm2211, %v1841, -inf
    %v2219 = vsel %vm2211, %v1873, -inf
    %v2220 = vsel %vm2212, %v1688, -inf
    %v2221 = vsel %vm2212, %v1720, -inf
    %v2222 = vsel %vm2212, %v1752, -inf
    %v2223 = vsel %vm2212, %v1784, -inf
    %v2224 = vsel %vm2212, %v1816, -inf
    %v2225 = vsel %vm2212, %v1848, -inf
    %v2226 = vsel %vm2212, %v1880, -inf
    %v2227 = vmax.f32 %v2213, %v2220
    %v2228 = vrot.slane %v2227, 4
    %v2229 = vmax.f32 %v2227, %v2228
    %v2230 = vrot.slane %v2229, 2
    %v2231 = vmax.f32 %v2229, %v2230
    %v2232 = vrot.slane %v2231, 1
    %v2233 = vmax.f32 %v2231, %v2232
    %v2234 = vmax.f32 %v2214, %v2221
    %v2235 = vrot.slane %v2234, 4
    %v2236 = vmax.f32 %v2234, %v2235
    %v2237 = vrot.slane %v2236, 2
    %v2238 = vmax.f32 %v2236, %v2237
    %v2239 = vrot.slane %v2238, 1
    %v2240 = vmax.f32 %v2238, %v2239
    %v2241 = vmax.f32 %v2215, %v2222
    %v2242 = vrot.slane %v2241, 4
    %v2243 = vmax.f32 %v2241, %v2242
    %v2244 = vrot.slane %v2243, 2
    %v2245 = vmax.f32 %v2243, %v2244
    %v2246 = vrot.slane %v2245, 1
    %v2247 = vmax.f32 %v2245, %v2246
    %v2248 = vmax.f32 %v2216, %v2223
    %v2249 = vrot.slane %v2248, 4
    %v2250 = vmax.f32 %v2248, %v2249
    %v2251 = vrot.slane %v2250, 2
    %v2252 = vmax.f32 %v2250, %v2251
    %v2253 = vrot.slane %v2252, 1
    %v2254 = vmax.f32 %v2252, %v2253
    %v2255 = vmax.f32 %v2217, %v2224
    %v2256 = vrot.slane %v2255, 4
    %v2257 = vmax.f32 %v2255, %v2256
    %v2258 = vrot.slane %v2257, 2
    %v2259 = vmax.f32 %v2257, %v2258
    %v2260 = vrot.slane %v2259, 1
    %v2261 = vmax.f32 %v2259, %v2260
    %v2262 = vmax.f32 %v2218, %v2225
    %v2263 = vrot.slane %v2262, 4
    %v2264 = vmax.f32 %v2262, %v2263
    %v2265 = vrot.slane %v2264, 2
    %v2266 = vmax.f32 %v2264, %v2265
    %v2267 = vrot.slane %v2266, 1
    %v2268 = vmax.f32 %v2266, %v2267
    %v2269 = vmax.f32 %v2219, %v2226
    %v2270 = vrot.slane %v2269, 4
    %v2271 = vmax.f32 %v2269, %v2270
    %v2272 = vrot.slane %v2271, 2
    %v2273 = vmax.f32 %v2271, %v2272
    %v2274 = vrot.slane %v2273, 1
    %v2275 = vmax.f32 %v2273, %v2274
    %p2276 = scmp.le.s32.totalorder %s2200, %s2192
    %s2277 = scalar_select %p2276, 1, 0
    %v2278 = vstv %s2277
    %vm2279 = vcmp.eq.s32.totalorder %v2278, 1
    %v2280 = vsel %vm2279, 0.0, %v2233
    %v2281 = vsel %vm2279, 0.0, %v2240
    %v2282 = vsel %vm2279, 0.0, %v2247
    %v2283 = vsel %vm2279, 0.0, %v2254
    %v2284 = vsel %vm2279, 0.0, %v2261
    %v2285 = vsel %vm2279, 0.0, %v2268
    %v2286 = vsel %vm2279, 0.0, %v2275
    %s2287 = sfloor.f32 %s2193
    %s2288 = scvt.f32.s32.to.zero.pseudo %s2287
    %s2289 = sadd.s32 %s2288, %s273
    %p2290 = scmp.gt.s32.totalorder %s2289, 0
    %s2291 = scalar_select %p2290, %s2289, 0
    %p2292 = scmp.lt.s32.totalorder %s2291, 16
    %s2293 = scalar_select %p2292, %s2291, 16
    %s2294 = smul.f32 %s301, 5.0
    %s2295 = sceil.f32 %s2294
    %s2296 = scvt.f32.s32.to.zero.pseudo %s2295
    %s2297 = sadd.s32 %s2296, %s273
    %p2298 = scmp.gt.s32.totalorder %s2297, 0
    %s2299 = scalar_select %p2298, %s2297, 0
    %p2300 = scmp.lt.s32.totalorder %s2299, 16
    %s2301 = scalar_select %p2300, %s2299, 16
    %v2302 = vstv %s2293
    %vm2303 = vcmp.ge.s32.totalorder %v313, %v2302
    %vm2304 = vcmp.ge.s32.totalorder %v314, %v2302
    %v2305 = vstv %s2301
    %vm2306 = vcmp.lt.s32.totalorder %v313, %v2305
    %vm2307 = vcmp.lt.s32.totalorder %v314, %v2305
    %vm2308 = vmand %vm2303, %vm2306
    %vm2309 = vmand %vm2304, %vm2307
    %v2310 = vsel %vm2308, 1, 0
    %v2311 = vsel %vm2309, 1, 0
    %vm2312 = vcmp.eq.s32.totalorder %v2310, 1
    %vm2313 = vcmp.eq.s32.totalorder %v2311, 1
    %v2314 = vsel %vm2312, %v1681, -inf
    %v2315 = vsel %vm2312, %v1713, -inf
    %v2316 = vsel %vm2312, %v1745, -inf
    %v2317 = vsel %vm2312, %v1777, -inf
    %v2318 = vsel %vm2312, %v1809, -inf
    %v2319 = vsel %vm2312, %v1841, -inf
    %v2320 = vsel %vm2312, %v1873, -inf
    %v2321 = vsel %vm2313, %v1688, -inf
    %v2322 = vsel %vm2313, %v1720, -inf
    %v2323 = vsel %vm2313, %v1752, -inf
    %v2324 = vsel %vm2313, %v1784, -inf
    %v2325 = vsel %vm2313, %v1816, -inf
    %v2326 = vsel %vm2313, %v1848, -inf
    %v2327 = vsel %vm2313, %v1880, -inf
    %v2328 = vmax.f32 %v2314, %v2321
    %v2329 = vrot.slane %v2328, 4
    %v2330 = vmax.f32 %v2328, %v2329
    %v2331 = vrot.slane %v2330, 2
    %v2332 = vmax.f32 %v2330, %v2331
    %v2333 = vrot.slane %v2332, 1
    %v2334 = vmax.f32 %v2332, %v2333
    %v2335 = vmax.f32 %v2315, %v2322
    %v2336 = vrot.slane %v2335, 4
    %v2337 = vmax.f32 %v2335, %v2336
    %v2338 = vrot.slane %v2337, 2
    %v2339 = vmax.f32 %v2337, %v2338
    %v2340 = vrot.slane %v2339, 1
    %v2341 = vmax.f32 %v2339, %v2340
    %v2342 = vmax.f32 %v2316, %v2323
    %v2343 = vrot.slane %v2342, 4
    %v2344 = vmax.f32 %v2342, %v2343
    %v2345 = vrot.slane %v2344, 2
    %v2346 = vmax.f32 %v2344, %v2345
    %v2347 = vrot.slane %v2346, 1
    %v2348 = vmax.f32 %v2346, %v2347
    %v2349 = vmax.f32 %v2317, %v2324
    %v2350 = vrot.slane %v2349, 4
    %v2351 = vmax.f32 %v2349, %v2350
    %v2352 = vrot.slane %v2351, 2
    %v2353 = vmax.f32 %v2351, %v2352
    %v2354 = vrot.slane %v2353, 1
    %v2355 = vmax.f32 %v2353, %v2354
    %v2356 = vmax.f32 %v2318, %v2325
    %v2357 = vrot.slane %v2356, 4
    %v2358 = vmax.f32 %v2356, %v2357
    %v2359 = vrot.slane %v2358, 2
    %v2360 = vmax.f32 %v2358, %v2359
    %v2361 = vrot.slane %v2360, 1
    %v2362 = vmax.f32 %v2360, %v2361
    %v2363 = vmax.f32 %v2319, %v2326
    %v2364 = vrot.slane %v2363, 4
    %v2365 = vmax.f32 %v2363, %v2364
    %v2366 = vrot.slane %v2365, 2
    %v2367 = vmax.f32 %v2365, %v2366
    %v2368 = vrot.slane %v2367, 1
    %v2369 = vmax.f32 %v2367, %v2368
    %v2370 = vmax.f32 %v2320, %v2327
    %v2371 = vrot.slane %v2370, 4
    %v2372 = vmax.f32 %v2370, %v2371
    %v2373 = vrot.slane %v2372, 2
    %v2374 = vmax.f32 %v2372, %v2373
    %v2375 = vrot.slane %v2374, 1
    %v2376 = vmax.f32 %v2374, %v2375
    %p2377 = scmp.le.s32.totalorder %s2301, %s2293
    %s2378 = scalar_select %p2377, 1, 0
    %v2379 = vstv %s2378
    %vm2380 = vcmp.eq.s32.totalorder %v2379, 1
    %v2381 = vsel %vm2380, 0.0, %v2334
    %v2382 = vsel %vm2380, 0.0, %v2341
    %v2383 = vsel %vm2380, 0.0, %v2348
    %v2384 = vsel %vm2380, 0.0, %v2355
    %v2385 = vsel %vm2380, 0.0, %v2362
    %v2386 = vsel %vm2380, 0.0, %v2369
    %v2387 = vsel %vm2380, 0.0, %v2376
    %s2388 = sfloor.f32 %s2294
    %s2389 = scvt.f32.s32.to.zero.pseudo %s2388
    %s2390 = sadd.s32 %s2389, %s273
    %p2391 = scmp.gt.s32.totalorder %s2390, 0
    %s2392 = scalar_select %p2391, %s2390, 0
    %p2393 = scmp.lt.s32.totalorder %s2392, 16
    %s2394 = scalar_select %p2393, %s2392, 16
    %s2395 = smul.f32 %s301, 6.0
    %s2396 = sceil.f32 %s2395
    %s2397 = scvt.f32.s32.to.zero.pseudo %s2396
    %s2398 = sadd.s32 %s2397, %s273
    %p2399 = scmp.gt.s32.totalorder %s2398, 0
    %s2400 = scalar_select %p2399, %s2398, 0
    %p2401 = scmp.lt.s32.totalorder %s2400, 16
    %s2402 = scalar_select %p2401, %s2400, 16
    %v2403 = vstv %s2394
    %vm2404 = vcmp.ge.s32.totalorder %v313, %v2403
    %vm2405 = vcmp.ge.s32.totalorder %v314, %v2403
    %v2406 = vstv %s2402
    %vm2407 = vcmp.lt.s32.totalorder %v313, %v2406
    %vm2408 = vcmp.lt.s32.totalorder %v314, %v2406
    %vm2409 = vmand %vm2404, %vm2407
    %vm2410 = vmand %vm2405, %vm2408
    %v2411 = vsel %vm2409, 1, 0
    %v2412 = vsel %vm2410, 1, 0
    %vm2413 = vcmp.eq.s32.totalorder %v2411, 1
    %vm2414 = vcmp.eq.s32.totalorder %v2412, 1
    %v2415 = vsel %vm2413, %v1681, -inf
    %v2416 = vsel %vm2413, %v1713, -inf
    %v2417 = vsel %vm2413, %v1745, -inf
    %v2418 = vsel %vm2413, %v1777, -inf
    %v2419 = vsel %vm2413, %v1809, -inf
    %v2420 = vsel %vm2413, %v1841, -inf
    %v2421 = vsel %vm2413, %v1873, -inf
    %v2422 = vsel %vm2414, %v1688, -inf
    %v2423 = vsel %vm2414, %v1720, -inf
    %v2424 = vsel %vm2414, %v1752, -inf
    %v2425 = vsel %vm2414, %v1784, -inf
    %v2426 = vsel %vm2414, %v1816, -inf
    %v2427 = vsel %vm2414, %v1848, -inf
    %v2428 = vsel %vm2414, %v1880, -inf
    %v2429 = vmax.f32 %v2415, %v2422
    %v2430 = vrot.slane %v2429, 4
    %v2431 = vmax.f32 %v2429, %v2430
    %v2432 = vrot.slane %v2431, 2
    %v2433 = vmax.f32 %v2431, %v2432
    %v2434 = vrot.slane %v2433, 1
    %v2435 = vmax.f32 %v2433, %v2434
    %v2436 = vmax.f32 %v2416, %v2423
    %v2437 = vrot.slane %v2436, 4
    %v2438 = vmax.f32 %v2436, %v2437
    %v2439 = vrot.slane %v2438, 2
    %v2440 = vmax.f32 %v2438, %v2439
    %v2441 = vrot.slane %v2440, 1
    %v2442 = vmax.f32 %v2440, %v2441
    %v2443 = vmax.f32 %v2417, %v2424
    %v2444 = vrot.slane %v2443, 4
    %v2445 = vmax.f32 %v2443, %v2444
    %v2446 = vrot.slane %v2445, 2
    %v2447 = vmax.f32 %v2445, %v2446
    %v2448 = vrot.slane %v2447, 1
    %v2449 = vmax.f32 %v2447, %v2448
    %v2450 = vmax.f32 %v2418, %v2425
    %v2451 = vrot.slane %v2450, 4
    %v2452 = vmax.f32 %v2450, %v2451
    %v2453 = vrot.slane %v2452, 2
    %v2454 = vmax.f32 %v2452, %v2453
    %v2455 = vrot.slane %v2454, 1
    %v2456 = vmax.f32 %v2454, %v2455
    %v2457 = vmax.f32 %v2419, %v2426
    %v2458 = vrot.slane %v2457, 4
    %v2459 = vmax.f32 %v2457, %v2458
    %v2460 = vrot.slane %v2459, 2
    %v2461 = vmax.f32 %v2459, %v2460
    %v2462 = vrot.slane %v2461, 1
    %v2463 = vmax.f32 %v2461, %v2462
    %v2464 = vmax.f32 %v2420, %v2427
    %v2465 = vrot.slane %v2464, 4
    %v2466 = vmax.f32 %v2464, %v2465
    %v2467 = vrot.slane %v2466, 2
    %v2468 = vmax.f32 %v2466, %v2467
    %v2469 = vrot.slane %v2468, 1
    %v2470 = vmax.f32 %v2468, %v2469
    %v2471 = vmax.f32 %v2421, %v2428
    %v2472 = vrot.slane %v2471, 4
    %v2473 = vmax.f32 %v2471, %v2472
    %v2474 = vrot.slane %v2473, 2
    %v2475 = vmax.f32 %v2473, %v2474
    %v2476 = vrot.slane %v2475, 1
    %v2477 = vmax.f32 %v2475, %v2476
    %p2478 = scmp.le.s32.totalorder %s2402, %s2394
    %s2479 = scalar_select %p2478, 1, 0
    %v2480 = vstv %s2479
    %vm2481 = vcmp.eq.s32.totalorder %v2480, 1
    %v2482 = vsel %vm2481, 0.0, %v2435
    %v2483 = vsel %vm2481, 0.0, %v2442
    %v2484 = vsel %vm2481, 0.0, %v2449
    %v2485 = vsel %vm2481, 0.0, %v2456
    %v2486 = vsel %vm2481, 0.0, %v2463
    %v2487 = vsel %vm2481, 0.0, %v2470
    %v2488 = vsel %vm2481, 0.0, %v2477
    %s2489 = sfloor.f32 %s2395
    %s2490 = scvt.f32.s32.to.zero.pseudo %s2489
    %s2491 = sadd.s32 %s2490, %s273
    %p2492 = scmp.gt.s32.totalorder %s2491, 0
    %s2493 = scalar_select %p2492, %s2491, 0
    %p2494 = scmp.lt.s32.totalorder %s2493, 16
    %s2495 = scalar_select %p2494, %s2493, 16
    %s2496 = smul.f32 %s301, 7.0
    %s2497 = sceil.f32 %s2496
    %s2498 = scvt.f32.s32.to.zero.pseudo %s2497
    %s2499 = sadd.s32 %s2498, %s273
    %p2500 = scmp.gt.s32.totalorder %s2499, 0
    %s2501 = scalar_select %p2500, %s2499, 0
    %p2502 = scmp.lt.s32.totalorder %s2501, 16
    %s2503 = scalar_select %p2502, %s2501, 16
    %v2504 = vstv %s2495
    %vm2505 = vcmp.ge.s32.totalorder %v313, %v2504
    %vm2506 = vcmp.ge.s32.totalorder %v314, %v2504
    %v2507 = vstv %s2503
    %vm2508 = vcmp.lt.s32.totalorder %v313, %v2507
    %vm2509 = vcmp.lt.s32.totalorder %v314, %v2507
    %vm2510 = vmand %vm2505, %vm2508
    %vm2511 = vmand %vm2506, %vm2509
    %v2512 = vsel %vm2510, 1, 0
    %v2513 = vsel %vm2511, 1, 0
    %vm2514 = vcmp.eq.s32.totalorder %v2512, 1
    %vm2515 = vcmp.eq.s32.totalorder %v2513, 1
    %v2516 = vsel %vm2514, %v1681, -inf
    %v2517 = vsel %vm2514, %v1713, -inf
    %v2518 = vsel %vm2514, %v1745, -inf
    %v2519 = vsel %vm2514, %v1777, -inf
    %v2520 = vsel %vm2514, %v1809, -inf
    %v2521 = vsel %vm2514, %v1841, -inf
    %v2522 = vsel %vm2514, %v1873, -inf
    %v2523 = vsel %vm2515, %v1688, -inf
    %v2524 = vsel %vm2515, %v1720, -inf
    %v2525 = vsel %vm2515, %v1752, -inf
    %v2526 = vsel %vm2515, %v1784, -inf
    %v2527 = vsel %vm2515, %v1816, -inf
    %v2528 = vsel %vm2515, %v1848, -inf
    %v2529 = vsel %vm2515, %v1880, -inf
    %v2530 = vmax.f32 %v2516, %v2523
    %v2531 = vrot.slane %v2530, 4
    %v2532 = vmax.f32 %v2530, %v2531
    %v2533 = vrot.slane %v2532, 2
    %v2534 = vmax.f32 %v2532, %v2533
    %v2535 = vrot.slane %v2534, 1
    %v2536 = vmax.f32 %v2534, %v2535
    %v2537 = vmax.f32 %v2517, %v2524
    %v2538 = vrot.slane %v2537, 4
    %v2539 = vmax.f32 %v2537, %v2538
    %v2540 = vrot.slane %v2539, 2
    %v2541 = vmax.f32 %v2539, %v2540
    %v2542 = vrot.slane %v2541, 1
    %v2543 = vmax.f32 %v2541, %v2542
    %v2544 = vmax.f32 %v2518, %v2525
    %v2545 = vrot.slane %v2544, 4
    %v2546 = vmax.f32 %v2544, %v2545
    %v2547 = vrot.slane %v2546, 2
    %v2548 = vmax.f32 %v2546, %v2547
    %v2549 = vrot.slane %v2548, 1
    %v2550 = vmax.f32 %v2548, %v2549
    %v2551 = vmax.f32 %v2519, %v2526
    %v2552 = vrot.slane %v2551, 4
    %v2553 = vmax.f32 %v2551, %v2552
    %v2554 = vrot.slane %v2553, 2
    %v2555 = vmax.f32 %v2553, %v2554
    %v2556 = vrot.slane %v2555, 1
    %v2557 = vmax.f32 %v2555, %v2556
    %v2558 = vmax.f32 %v2520, %v2527
    %v2559 = vrot.slane %v2558, 4
    %v2560 = vmax.f32 %v2558, %v2559
    %v2561 = vrot.slane %v2560, 2
    %v2562 = vmax.f32 %v2560, %v2561
    %v2563 = vrot.slane %v2562, 1
    %v2564 = vmax.f32 %v2562, %v2563
    %v2565 = vmax.f32 %v2521, %v2528
    %v2566 = vrot.slane %v2565, 4
    %v2567 = vmax.f32 %v2565, %v2566
    %v2568 = vrot.slane %v2567, 2
    %v2569 = vmax.f32 %v2567, %v2568
    %v2570 = vrot.slane %v2569, 1
    %v2571 = vmax.f32 %v2569, %v2570
    %v2572 = vmax.f32 %v2522, %v2529
    %v2573 = vrot.slane %v2572, 4
    %v2574 = vmax.f32 %v2572, %v2573
    %v2575 = vrot.slane %v2574, 2
    %v2576 = vmax.f32 %v2574, %v2575
    %v2577 = vrot.slane %v2576, 1
    %v2578 = vmax.f32 %v2576, %v2577
    %p2579 = scmp.le.s32.totalorder %s2503, %s2495
    %s2580 = scalar_select %p2579, 1, 0
    %v2581 = vstv %s2580
    %vm2582 = vcmp.eq.s32.totalorder %v2581, 1
    %v2583 = vsel %vm2582, 0.0, %v2536
    %v2584 = vsel %vm2582, 0.0, %v2543
    %v2585 = vsel %vm2582, 0.0, %v2550
    %v2586 = vsel %vm2582, 0.0, %v2557
    %v2587 = vsel %vm2582, 0.0, %v2564
    %v2588 = vsel %vm2582, 0.0, %v2571
    %v2589 = vsel %vm2582, 0.0, %v2578
    %vm2590 = vcmask 1040384
    %v2591 = vsel %vm2590, %v1977, %v2078
    %v2592 = vsel %vm2590, %v1978, %v2079
    %v2593 = vsel %vm2590, %v1979, %v2080
    %v2594 = vsel %vm2590, %v1980, %v2081
    %v2595 = vsel %vm2590, %v1981, %v2082
    %v2596 = vsel %vm2590, %v1982, %v2083
    %v2597 = vsel %vm2590, %v1983, %v2084
    %vm2598 = vcmask 1041408
    %v2599 = vsel %vm2598, %v2591, %v2179
    %v2600 = vsel %vm2598, %v2592, %v2180
    %v2601 = vsel %vm2598, %v2593, %v2181
    %v2602 = vsel %vm2598, %v2594, %v2182
    %v2603 = vsel %vm2598, %v2595, %v2183
    %v2604 = vsel %vm2598, %v2596, %v2184
    %v2605 = vsel %vm2598, %v2597, %v2185
    %vm2606 = vcmask 1042432
    %v2607 = vsel %vm2606, %v2599, %v2280
    %v2608 = vsel %vm2606, %v2600, %v2281
    %v2609 = vsel %vm2606, %v2601, %v2282
    %v2610 = vsel %vm2606, %v2602, %v2283
    %v2611 = vsel %vm2606, %v2603, %v2284
    %v2612 = vsel %vm2606, %v2604, %v2285
    %v2613 = vsel %vm2606, %v2605, %v2286
    %vm2614 = vcmask 1043456
    %v2615 = vsel %vm2614, %v2607, %v2381
    %v2616 = vsel %vm2614, %v2608, %v2382
    %v2617 = vsel %vm2614, %v2609, %v2383
    %v2618 = vsel %vm2614, %v2610, %v2384
    %v2619 = vsel %vm2614, %v2611, %v2385
    %v2620 = vsel %vm2614, %v2612, %v2386
    %v2621 = vsel %vm2614, %v2613, %v2387
    %vm2622 = vcmask 1044480
    %v2623 = vsel %vm2622, %v2615, %v2482
    %v2624 = vsel %vm2622, %v2616, %v2483
    %v2625 = vsel %vm2622, %v2617, %v2484
    %v2626 = vsel %vm2622, %v2618, %v2485
    %v2627 = vsel %vm2622, %v2619, %v2486
    %v2628 = vsel %vm2622, %v2620, %v2487
    %v2629 = vsel %vm2622, %v2621, %v2488
    %vm2630 = vcmask 1045504
    %v2631 = vsel %vm2630, %v2623, %v2583
    %v2632 = vsel %vm2630, %v2624, %v2584
    %v2633 = vsel %vm2630, %v2625, %v2585
    %v2634 = vsel %vm2630, %v2626, %v2586
    %v2635 = vsel %vm2630, %v2627, %v2587
    %v2636 = vsel %vm2630, %v2628, %v2588
    %v2637 = vsel %vm2630, %v2629, %v2589
    %2638 = vst [vmem:[#allocation9] sm:$0x7f] %v2631
    %2639 = vst [vmem:[#allocation9 + $0x8] sm:$0x7f] %v2632
    %2640 = vst [vmem:[#allocation9 + $0x10] sm:$0x7f] %v2633
    %2641 = vst [vmem:[#allocation9 + $0x18] sm:$0x7f] %v2634
    %2642 = vst [vmem:[#allocation9 + $0x20] sm:$0x7f] %v2635
    %2643 = vst [vmem:[#allocation9 + $0x28] sm:$0x7f] %v2636
    %2644 = vst [vmem:[#allocation9 + $0x30] sm:$0x7f] %v2637
    // Predicated region
    $region30: #{tpu_custom_call.1} parent=1 // pred_check
      _
    $region31: #{tpu_custom_call.1} parent=1 // pred_check_branch
      %2646 = sbr.rel (0) target = $region33
    $region32: #{tpu_custom_call.1} parent=1 // pred_region
      %2648 = vsyncadd [#allocation4], 0
      %s2650 = sshll.u32 [#allocation9], 4
      %s2651 = int_to_ptr.vmem [resolvable:$true] %s2650
      %s2652 = sshll.u32 %s4, 4
      %s2653 = int_to_ptr.hbm [resolvable:$true] %s2652
      %2655 = dma.vmem_to_hbm [thread:$0]  %s2651, 896, %s2653, [#allocation4]
    $region33: #{tpu_custom_call.1} parent=1 // pred_fallthru
      _
    // Predicated region
    $region34: #{tpu_custom_call.1} parent=1 // pred_check
      _
    $region35: #{tpu_custom_call.1} parent=1 // pred_check_branch
      %2657 = sbr.rel (0) target = $region37
    $region36: #{tpu_custom_call.1} parent=1 // pred_region
      %2659 = vsyncadd [#allocation11], 0
      %s2660 = sshll.u32 [#allocation10], 4
      %s2661 = int_to_ptr.vmem [resolvable:$true] %s2660
      %s2662 = sshll.u32 %s5, 4
      %s2663 = int_to_ptr.hbm [resolvable:$true] %s2662
      %2668 = dma.vmem_to_hbm [thread:$0]  %s2661, 4096, %s2663, [#allocation11], 128, 128, 8
    $region37: #{tpu_custom_call.1} parent=1 // pred_fallthru
      _
    // Predicated region
    $region38: #{tpu_custom_call.1} parent=1 // pred_check
      _
    $region39: #{tpu_custom_call.1} parent=1 // pred_check_branch
      %2670 = sbr.rel (0) target = $region41
    $region40: #{tpu_custom_call.1} parent=1 // pred_region
      %2672 = dma.done [#allocation4], 896
    $region41: #{tpu_custom_call.1} parent=1 // pred_fallthru
      _
    // Predicated region
    $region42: #{tpu_custom_call.1} parent=1 // pred_check
      _
    $region43: #{tpu_custom_call.1} parent=1 // pred_check_branch
      %2674 = sbr.rel (0) target = $region45
    $region44: #{tpu_custom_call.1} parent=1 // pred_region
      %2676 = dma.done [#allocation11], 4096
    $region45: #{tpu_custom_call.1} parent=1 // pred_fallthru
      _
    %2677 = vsyncpa [#allocation3], 1
    %2678 = vsyncpa [#allocation8], 1
    %2679 = vsyncpa [#allocation4], 1
    %2680 = vsyncpa [#allocation11], 1
    %2681 = vsyncpa [#allocation5], 1

</llo_original>
